<compile_context>
chip_gen: v6e
topology: v6e:2x2x1
jax: 0.10.0
libtpu: 0.0.40
codegen_flags: <defaults>
</compile_context>

<pallas_src>
import functools

import jax
import jax.numpy as jnp
from jax.experimental import pallas as pl
from jax.experimental.pallas import tpu as pltpu

LANE = 128
VMEM_LIMIT = 48 << 20        # below v7x's 64 MiB physical; ample on v5e/v6e (128 MiB)
A_RESIDENT_BYTES = 20 << 20  # fuse both layers with resident A_hat when A fits (~n_pad <= 3.2K)


def _round_up(x, m):
    return ((x + m - 1) // m) * m


def _pow2_tile(limit):
    """Largest 128 * 2^j <= limit (limit >= 128)."""
    t = LANE
    while t * 2 <= limit:
        t *= 2
    return t


# ---------------------------------------------------------------------------
# Streaming GCN layer:  H = relu(A_hat @ (X @ W) + b)
#   grid = (row tiles, contraction tiles); A_hat streamed tile-by-tile,
#   X kept VMEM-resident (constant BlockSpec), f32 VMEM accumulator, bf16 out.
# ---------------------------------------------------------------------------
def _layer_stream_kernel(a_ref, x_ref, w_ref, b_ref, o_ref, acc_ref, *, tk):
    k = pl.program_id(1)

    @pl.when(k == 0)
    def _():
        acc_ref[...] = jnp.zeros_like(acc_ref)

    start = pl.multiple_of(k * tk, tk)
    xw = jnp.dot(
        x_ref[pl.ds(start, tk), :], w_ref[...],
        preferred_element_type=jnp.float32,
    ).astype(jnp.bfloat16)
    acc_ref[...] += jnp.dot(a_ref[...], xw, preferred_element_type=jnp.float32)

    @pl.when(k == pl.num_programs(1) - 1)
    def _():
        o_ref[...] = jnp.maximum(acc_ref[...] + b_ref[...], 0.0).astype(o_ref.dtype)


def gcn_layer_stream(a_bf16, x_bf16, w, b, *, tm, tk):
    n_pad = a_bf16.shape[0]
    kernel = functools.partial(_layer_stream_kernel, tk=tk)
    return pl.pallas_call(
        kernel,
        out_shape=jax.ShapeDtypeStruct((n_pad, LANE), jnp.bfloat16),
        grid_spec=pltpu.PrefetchScalarGridSpec(
            num_scalar_prefetch=0,
            grid=(n_pad // tm, n_pad // tk),
            in_specs=[
                pl.BlockSpec((tm, tk), lambda i, k: (i, k)),       # A_hat tile (streamed)
                pl.BlockSpec((n_pad, LANE), lambda i, k: (0, 0)),  # X (VMEM-resident)
                pl.BlockSpec((LANE, LANE), lambda i, k: (0, 0)),   # W (resident)
                pl.BlockSpec((1, LANE), lambda i, k: (0, 0)),      # bias
            ],
            out_specs=pl.BlockSpec((tm, LANE), lambda i, k: (i, 0)),
            scratch_shapes=[pltpu.VMEM((tm, LANE), jnp.float32)],
        ),
        compiler_params=pltpu.CompilerParams(
            dimension_semantics=("parallel", "arbitrary"),
            vmem_limit_bytes=VMEM_LIMIT,
        ),
    )(a_bf16, x_bf16, w, b)


# ---------------------------------------------------------------------------
# Small/medium-graph fast path: both layers in ONE kernel, A_hat resident in
# VMEM (DMA'd from HBM exactly once instead of once per layer).
# ---------------------------------------------------------------------------
def _two_layer_fused_kernel(a_ref, x_ref, w1_ref, b1_ref, w2_ref, b2_ref, o_ref):
    xw1 = jnp.dot(
        x_ref[...], w1_ref[...], preferred_element_type=jnp.float32
    ).astype(jnp.bfloat16)
    h1 = jnp.maximum(
        jnp.dot(a_ref[...], xw1, preferred_element_type=jnp.float32) + b1_ref[...],
        0.0)
    xw2 = jnp.dot(
        h1.astype(jnp.bfloat16), w2_ref[...], preferred_element_type=jnp.float32
    ).astype(jnp.bfloat16)
    h2 = jnp.maximum(
        jnp.dot(a_ref[...], xw2, preferred_element_type=jnp.float32) + b2_ref[...],
        0.0)
    o_ref[...] = h2.astype(o_ref.dtype)


def gcn_two_layers_fused(a_bf16, x_bf16, w1, b1, w2, b2):
    n_pad = a_bf16.shape[0]
    return pl.pallas_call(
        _two_layer_fused_kernel,
        out_shape=jax.ShapeDtypeStruct((n_pad, LANE), jnp.bfloat16),
        compiler_params=pltpu.CompilerParams(vmem_limit_bytes=VMEM_LIMIT),
    )(a_bf16, x_bf16, w1, b1, w2, b2)


# ---------------------------------------------------------------------------
# global max-pool + mean-pool + Linear head, tiled over node chunks.
#   out = gmp @ Wfc[:C] + gap @ Wfc[C:] + bfc   (concat folded into two dots)
# ---------------------------------------------------------------------------
def _pool_fc_kernel(x_ref, m_ref, mt_ref, wmax_ref, wmean_ref, b_ref, o_ref,
                    max_acc, sum_acc, cnt_acc, *, num_graphs):
    j = pl.program_id(0)
    NEG = jnp.float32(-3.0e38)
    b_pad = max_acc.shape[0]

    @pl.when(j == 0)
    def _():
        max_acc[...] = jnp.full_like(max_acc, NEG)
        sum_acc[...] = jnp.zeros_like(sum_acc)
        cnt_acc[...] = jnp.zeros_like(cnt_acc)

    x = x_ref[...].astype(jnp.float32)   # (tn, C) node-chunk activations
    mask = m_ref[...]                    # (b_pad, tn) one-hot membership
    mask_t = mt_ref[...]                 # (tn, b_pad) same, nodes on sublanes

    # mean-pool accumulation: MXU matmul + lane reduction for counts.
    sum_acc[...] += jnp.dot(mask, x, preferred_element_type=jnp.float32)
    cnt_acc[...] = cnt_acc[...] + jnp.sum(mask, axis=1, keepdims=True)

    # max-pool accumulation: per-graph masked max rows stacked into one value,
    # merged with a single dense scratch write (no per-graph partial stores).
    rows = []
    for g in range(b_pad):
        if g < num_graphs:
            col = mask_t[:, g:g + 1]                                     # (tn, 1)
            rows.append(jnp.max(jnp.where(col > 0.0, x, NEG),
                                axis=0, keepdims=True))
        else:
            rows.append(jnp.full((1, x.shape[1]), NEG, jnp.float32))
    stacked = jnp.concatenate(rows, axis=0)                              # (b_pad, C)
    max_acc[...] = jnp.maximum(max_acc[...], stacked)

    @pl.when(j == pl.num_programs(0) - 1)
    def _():
        cnt = cnt_acc[...]
        inv = pl.reciprocal(jnp.maximum(cnt, 1.0), approx=True)   # EUP slot
        meanp = sum_acc[...] * inv
        maxp = jnp.where(cnt > 0.0, max_acc[...], 0.0)            # empty-graph guard
        out = (jnp.dot(maxp, wmax_ref[...], preferred_element_type=jnp.float32)
               + jnp.dot(meanp, wmean_ref[...], preferred_element_type=jnp.float32)
               + b_ref[...])
        o_ref[...] = out


def pool_fc(h, mask, mask_t, w_max, w_mean, b_fc, *, num_graphs, tn):
    n_pad = h.shape[0]
    b_pad = mask.shape[0]
    kernel = functools.partial(_pool_fc_kernel, num_graphs=num_graphs)
    return pl.pallas_call(
        kernel,
        out_shape=jax.ShapeDtypeStruct((b_pad, LANE), jnp.float32),
        grid_spec=pltpu.PrefetchScalarGridSpec(
            num_scalar_prefetch=0,
            grid=(n_pad // tn,),
            in_specs=[
                pl.BlockSpec((tn, LANE), lambda j: (j, 0)),
                pl.BlockSpec((b_pad, tn), lambda j: (0, j)),
                pl.BlockSpec((tn, b_pad), lambda j: (j, 0)),
                pl.BlockSpec((LANE, LANE), lambda j: (0, 0)),
                pl.BlockSpec((LANE, LANE), lambda j: (0, 0)),
                pl.BlockSpec((1, LANE), lambda j: (0, 0)),
            ],
            out_specs=pl.BlockSpec((b_pad, LANE), lambda j: (0, 0)),
            scratch_shapes=[
                pltpu.VMEM((b_pad, LANE), jnp.float32),   # running max
                pltpu.VMEM((b_pad, LANE), jnp.float32),   # running sum
                pltpu.VMEM((b_pad, LANE), jnp.float32),   # running counts
            ],
        ),
        compiler_params=pltpu.CompilerParams(
            dimension_semantics=("arbitrary",),
            vmem_limit_bytes=VMEM_LIMIT,
        ),
    )(h, mask, mask_t, w_max, w_mean, b_fc)


# ---------------------------------------------------------------------------
# Glue (plain JAX): symmetrically-normalized dense adjacency built directly at
# padded size and cast in one pass (no extra padded f32 copy).  The scatter-add
# over edge_index has no clean dense-Pallas equivalent.
# Semantics follow PyG GCNConv: duplicate edges count; self-loops (weight 1)
# added only for nodes that do not already have one.
# ---------------------------------------------------------------------------
def build_norm_adj_padded(edge_index, num_nodes, n_pad, dtype):
    src, dst = edge_index[0], edge_index[1]
    adj = jnp.zeros((n_pad, n_pad), jnp.float32).at[dst, src].add(1.0)
    idx = jnp.arange(num_nodes)
    adj = adj.at[idx, idx].max(jnp.ones((num_nodes,), jnp.float32))
    deg = adj.sum(axis=1)
    dinv = jnp.where(deg > 0, 1.0 / jnp.sqrt(deg), 0.0)
    return (adj * dinv[:, None] * dinv[None, :]).astype(dtype)


def _pad2(a, shape):
    out = jnp.zeros(shape, jnp.float32)
    return out.at[: a.shape[0], : a.shape[1]].set(a)


def gcn_forward(x, edge_index, batch, params, *, num_graphs,
                tm_pref=512, tk_pref=1024, force_streaming=False):
    n, f_in = x.shape

    # --- tiling: big tiles, pad N up to the tile instead of shrinking tiles ---
    n_pad0 = _round_up(max(n, LANE), LANE)
    tm = _pow2_tile(min(tm_pref, n_pad0))
    tk = _pow2_tile(min(tk_pref, n_pad0))
    n_pad = _round_up(n_pad0, max(tm, tk))
    if n_pad // tm == 1 and tm > LANE:
        tm //= 2        # keep >= 2 row tiles so both v7x TensorCores get work

    # Normalized adjacency, built at padded size, bf16 for the big matmuls.
    a_bf16 = build_norm_adj_padded(edge_index, n, n_pad, jnp.bfloat16)

    # Lane-dense (128-wide) padded features / parameters.
    c_out2 = params["w2"].shape[1]          # 16
    o_real = params["w_fc"].shape[1]        # 2

    x_pad = _pad2(x, (n_pad, LANE)).astype(jnp.bfloat16)
    w1 = _pad2(params["w1"], (LANE, LANE)).astype(jnp.bfloat16)
    b1 = _pad2(params["b1"], (1, LANE))
    w2 = _pad2(params["w2"], (LANE, LANE)).astype(jnp.bfloat16)
    b2 = _pad2(params["b2"], (1, LANE))
    w_max = _pad2(params["w_fc"][:c_out2], (LANE, LANE))
    w_mean = _pad2(params["w_fc"][c_out2:], (LANE, LANE))
    b_fc = _pad2(params["b_fc"], (1, LANE))

    # Pooling masks (padded nodes -> graph id -1, matches nothing).
    b_pad = _round_up(max(num_graphs, 8), 8)
    batch_pad = jnp.full((n_pad,), -1, jnp.int32).at[:n].set(batch.astype(jnp.int32))
    mask = (batch_pad[None, :] == jnp.arange(b_pad, dtype=jnp.int32)[:, None]
            ).astype(jnp.float32)
    mask_t = mask.T

    a_bytes = n_pad * n_pad * 2
    if (not force_streaming) and a_bytes <= A_RESIDENT_BYTES:
        # A_hat resident in VMEM; both layers fused -> A read from HBM once.
        h2 = gcn_two_layers_fused(a_bf16, x_pad, w1, b1, w2, b2)
    else:
        # Streaming path: A tiled (tm, tk), X resident, bf16 layer outputs.
        h1 = gcn_layer_stream(a_bf16, x_pad, w1, b1, tm=tm, tk=tk)
        h2 = gcn_layer_stream(a_bf16, h1, w2, b2, tm=tm, tk=tk)

    out = pool_fc(h2, mask, mask_t, w_max, w_mean, b_fc,
                  num_graphs=num_graphs, tn=tm)
    return out[:num_graphs, :o_real]


gcn_forward_jit = jax.jit(
    gcn_forward,
    static_argnames=("num_graphs", "tm_pref", "tk_pref", "force_streaming"))


# ---------------------------------------------------------------------------
# Pure-JAX (f32) reference for a sanity check.
# ---------------------------------------------------------------------------
def gcn_forward_ref(x, edge_index, batch, params, *, num_graphs):
    n = x.shape[0]
    a_hat = build_norm_adj_padded(edge_index, n, n, jnp.float32)
    mask = (batch[None, :] == jnp.arange(num_graphs)[:, None]).astype(jnp.float32)
    h = jnp.maximum(a_hat @ (x @ params["w1"]) + params["b1"], 0.0)
    h = jnp.maximum(a_hat @ (h @ params["w2"]) + params["b2"], 0.0)
    counts = mask.sum(axis=1, keepdims=True)
    meanp = (mask @ h) / jnp.maximum(counts, 1.0)
    neg = jnp.float32(-3.0e38)
    maxp = jnp.max(jnp.where(mask[:, :, None] > 0, h[None, :, :], neg), axis=1)
    maxp = jnp.where(counts > 0, maxp, 0.0)
    feat = jnp.concatenate([maxp, meanp], axis=1)
    return feat @ params["w_fc"] + params["b_fc"]


if __name__ == "__main__":
    key = jax.random.PRNGKey(0)
    k_x, k1, k2, k3, k4 = jax.random.split(key, 5)

    # Small synthetic graph batch: 2 graphs x 8 nodes, ring topology each.
    N, F_IN, NUM_GRAPHS = 16, 4, 2
    batch = jnp.array([0] * 8 + [1] * 8, dtype=jnp.int32)
    edges = []
    for g in range(NUM_GRAPHS):
        base = g * 8
        for i in range(8):
            a, b = base + i, base + (i + 1) % 8
            edges.append((a, b))
            edges.append((b, a))
    edge_index = jnp.array(edges, dtype=jnp.int32).T          # (2, E)
    x = jax.random.normal(k_x, (N, F_IN), dtype=jnp.float32)

    # Parameter shapes from GCN.__init__:
    #   conv1: GCNConv(4, 8), conv2: GCNConv(8, 16), fc: Linear(32, 2)
    params = {
        "w1": jax.random.normal(k1, (F_IN, 8), jnp.float32) / jnp.sqrt(F_IN),
        "b1": jnp.zeros((1, 8), jnp.float32),
        "w2": jax.random.normal(k2, (8, 16), jnp.float32) / jnp.sqrt(8.0),
        "b2": jnp.zeros((1, 16), jnp.float32),
        "w_fc": jax.random.normal(k3, (32, 2), jnp.float32) / jnp.sqrt(32.0),
        "b_fc": 0.01 * jax.random.normal(k4, (1, 2), jnp.float32),
    }

    ref = gcn_forward_ref(x, edge_index, batch, params, num_graphs=NUM_GRAPHS)

    # Path 1: fused A_hat-resident two-layer kernel (default for small graphs).
    out_fused = gcn_forward_jit(x, edge_index, batch, params,
                                num_graphs=NUM_GRAPHS)
    out_fused = jax.block_until_ready(out_fused)
    assert out_fused.shape == (NUM_GRAPHS, 2)
    # bf16 A_hat / activations (f32 MXU accumulation) + approx reciprocal.
    assert jnp.allclose(out_fused, ref, atol=5e-2, rtol=5e-2), (out_fused, ref)

    # Path 2: streaming tiled aggregation (used for large graphs) — exercise it
    # too so both code paths are compile- and correctness-checked.
    out_stream = gcn_forward_jit(x, edge_index, batch, params,
                                 num_graphs=NUM_GRAPHS, force_streaming=True)
    out_stream = jax.block_until_ready(out_stream)
    assert out_stream.shape == (NUM_GRAPHS, 2)
    assert jnp.allclose(out_stream, ref, atol=5e-2, rtol=5e-2), (out_stream, ref)

    print("KERNEL_OK")
</pallas_src>

<mosaic_0001>
module attributes {stable_mosaic.version = 11 : i64} {
  func.func private @main(%arg0: i32) attributes {dimension_semantics = [#tpu.dimension_semantics<core_parallel>], iteration_bounds = array<i64: 2>, tpu.core_type = #tpu.core_type<sc_scalar_subcore>, window_params = []} {
    return
  }
}

module attributes {stable_mosaic.version = 11 : i64} {
  func.func private @main(%arg0: i32) attributes {dimension_semantics = [#tpu.dimension_semantics<core_parallel>], iteration_bounds = array<i64: 2>, tpu.core_type = #tpu.core_type<sc_scalar_subcore>, window_params = []} {
    return
  }
}

module attributes {stable_mosaic.version = 11 : i64} {
  func.func @_two_layer_fused_kernel(%arg0: memref<128x128xbf16, #tpu.memory_space<vmem>>, %arg1: memref<128x128xbf16, #tpu.memory_space<vmem>>, %arg2: memref<128x128xbf16, #tpu.memory_space<vmem>>, %arg3: memref<1x128xf32, #tpu.memory_space<vmem>>, %arg4: memref<128x128xbf16, #tpu.memory_space<vmem>>, %arg5: memref<1x128xf32, #tpu.memory_space<vmem>>, %arg6: memref<128x128xbf16, #tpu.memory_space<vmem>>) attributes {dimension_semantics = [], scalar_prefetch = 0 : i64, scratch_operands = 0 : i64, tpu.core_type = #tpu.core_type<tc>} {
    %c0 = arith.constant 0 : index
    %c0_0 = arith.constant 0 : index
    %0 = vector.load %arg1[%c0, %c0_0] : memref<128x128xbf16, #tpu.memory_space<vmem>>, vector<128x128xbf16>
    %c0_1 = arith.constant 0 : index
    %c0_2 = arith.constant 0 : index
    %1 = vector.load %arg2[%c0_1, %c0_2] : memref<128x128xbf16, #tpu.memory_space<vmem>>, vector<128x128xbf16>
    %cst = arith.constant dense<0.000000e+00> : vector<128x128xf32>
    %2 = tpu.matmul %0, %1, %cst {dimension_numbers = #tpu.dot_dimension_numbers<[1], [0], [0], [1], [0, 0, 1, 1], [], []>} : vector<128x128xbf16>, vector<128x128xbf16>, vector<128x128xf32> -> vector<128x128xf32>
    %3 = arith.truncf %2 : vector<128x128xf32> to vector<128x128xbf16>
    %c0_3 = arith.constant 0 : index
    %c0_4 = arith.constant 0 : index
    %4 = vector.load %arg0[%c0_3, %c0_4] : memref<128x128xbf16, #tpu.memory_space<vmem>>, vector<128x128xbf16>
    %cst_5 = arith.constant dense<0.000000e+00> : vector<128x128xf32>
    %5 = tpu.matmul %4, %3, %cst_5 {dimension_numbers = #tpu.dot_dimension_numbers<[1], [0], [0], [1], [0, 0, 1, 1], [], []>} : vector<128x128xbf16>, vector<128x128xbf16>, vector<128x128xf32> -> vector<128x128xf32>
    %c0_6 = arith.constant 0 : index
    %c0_7 = arith.constant 0 : index
    %6 = vector.load %arg3[%c0_6, %c0_7] : memref<1x128xf32, #tpu.memory_space<vmem>>, vector<1x128xf32>
    %7 = vector.broadcast %6 : vector<1x128xf32> to vector<128x128xf32>
    %8 = arith.addf %5, %7 : vector<128x128xf32>
    %cst_8 = arith.constant 0.000000e+00 : f32
    %9 = vector.broadcast %cst_8 : f32 to vector<128x128xf32>
    %10 = arith.maximumf %8, %9 : vector<128x128xf32>
    %11 = arith.truncf %10 : vector<128x128xf32> to vector<128x128xbf16>
    %c0_9 = arith.constant 0 : index
    %c0_10 = arith.constant 0 : index
    %12 = vector.load %arg4[%c0_9, %c0_10] : memref<128x128xbf16, #tpu.memory_space<vmem>>, vector<128x128xbf16>
    %cst_11 = arith.constant dense<0.000000e+00> : vector<128x128xf32>
    %13 = tpu.matmul %11, %12, %cst_11 {dimension_numbers = #tpu.dot_dimension_numbers<[1], [0], [0], [1], [0, 0, 1, 1], [], []>} : vector<128x128xbf16>, vector<128x128xbf16>, vector<128x128xf32> -> vector<128x128xf32>
    %14 = arith.truncf %13 : vector<128x128xf32> to vector<128x128xbf16>
    %c0_12 = arith.constant 0 : index
    %c0_13 = arith.constant 0 : index
    %15 = vector.load %arg0[%c0_12, %c0_13] : memref<128x128xbf16, #tpu.memory_space<vmem>>, vector<128x128xbf16>
    %cst_14 = arith.constant dense<0.000000e+00> : vector<128x128xf32>
    %16 = tpu.matmul %15, %14, %cst_14 {dimension_numbers = #tpu.dot_dimension_numbers<[1], [0], [0], [1], [0, 0, 1, 1], [], []>} : vector<128x128xbf16>, vector<128x128xbf16>, vector<128x128xf32> -> vector<128x128xf32>
    %c0_15 = arith.constant 0 : index
    %c0_16 = arith.constant 0 : index
    %17 = vector.load %arg5[%c0_15, %c0_16] : memref<1x128xf32, #tpu.memory_space<vmem>>, vector<1x128xf32>
    %18 = vector.broadcast %17 : vector<1x128xf32> to vector<128x128xf32>
    %19 = arith.addf %16, %18 : vector<128x128xf32>
    %cst_17 = arith.constant 0.000000e+00 : f32
    %20 = vector.broadcast %cst_17 : f32 to vector<128x128xf32>
    %21 = arith.maximumf %19, %20 : vector<128x128xf32>
    %22 = arith.truncf %21 : vector<128x128xf32> to vector<128x128xbf16>
    %c0_18 = arith.constant 0 : index
    %c0_19 = arith.constant 0 : index
    %23 = vector.load %arg6[%c0_18, %c0_19] : memref<128x128xbf16, #tpu.memory_space<vmem>>, vector<128x128xbf16>
    tpu.vector_store %arg6[%c0_18, %c0_19], %22 {strides = array<i32>} : memref<128x128xbf16, #tpu.memory_space<vmem>>, vector<128x128xbf16>,
    return
  }
}

module attributes {stable_mosaic.version = 11 : i64} {
  func.func @_pool_fc_kernel(%arg0: i32, %arg1: memref<128x128xbf16, #tpu.memory_space<vmem>>, %arg2: memref<8x128xf32, #tpu.memory_space<vmem>>, %arg3: memref<128x8xf32, #tpu.memory_space<vmem>>, %arg4: memref<128x128xf32, #tpu.memory_space<vmem>>, %arg5: memref<128x128xf32, #tpu.memory_space<vmem>>, %arg6: memref<1x128xf32, #tpu.memory_space<vmem>>, %arg7: memref<8x128xf32, #tpu.memory_space<vmem>>, %arg8: memref<8x128xf32, #tpu.memory_space<vmem>>, %arg9: memref<8x128xf32, #tpu.memory_space<vmem>>, %arg10: memref<8x128xf32, #tpu.memory_space<vmem>>) attributes {dimension_semantics = [#tpu.dimension_semantics<arbitrary>], iteration_bounds = array<i64: 1>, scalar_prefetch = 0 : i64, scratch_operands = 3 : i64, tpu.core_type = #tpu.core_type<tc>, window_params = [{transform_indices = @transform_0, window_bounds = array<i64: 128, 128>}, {transform_indices = @transform_1, window_bounds = array<i64: 8, 128>}, {transform_indices = @transform_2, window_bounds = array<i64: 128, 8>}, {pipeline_mode = #tpu.pipeline_mode<synchronous>, transform_indices = @transform_3, window_bounds = array<i64: 128, 128>}, {pipeline_mode = #tpu.pipeline_mode<synchronous>, transform_indices = @transform_4, window_bounds = array<i64: 128, 128>}, {pipeline_mode = #tpu.pipeline_mode<synchronous>, transform_indices = @transform_5, window_bounds = array<i64: 1, 128>}, {pipeline_mode = #tpu.pipeline_mode<synchronous>, transform_indices = @transform_6, window_bounds = array<i64: 8, 128>}]} {
    %c0_i32 = arith.constant 0 : i32
    %0 = arith.cmpi eq, %arg0, %c0_i32 : i32
    %1 = arith.extui %0 : i1 to i32
    %cst = arith.constant -3.000000e+38 : f32
    %c0_i32_0 = arith.constant 0 : i32
    %2 = arith.cmpi ne, %1, %c0_i32_0 : i32
    scf.if %2 {
      %48 = vector.broadcast %cst : f32 to vector<8x128xf32>
      %c0_34 = arith.constant 0 : index
      %c0_35 = arith.constant 0 : index
      %49 = vector.load %arg8[%c0_34, %c0_35] : memref<8x128xf32, #tpu.memory_space<vmem>>, vector<8x128xf32>
      tpu.vector_store %arg8[%c0_34, %c0_35], %48 {strides = array<i32>} : memref<8x128xf32, #tpu.memory_space<vmem>>, vector<8x128xf32>,
      %cst_36 = arith.constant 0.000000e+00 : f32
      %50 = vector.broadcast %cst_36 : f32 to vector<8x128xf32>
      %c0_37 = arith.constant 0 : index
      %c0_38 = arith.constant 0 : index
      %51 = vector.load %arg9[%c0_37, %c0_38] : memref<8x128xf32, #tpu.memory_space<vmem>>, vector<8x128xf32>
      tpu.vector_store %arg9[%c0_37, %c0_38], %50 {strides = array<i32>} : memref<8x128xf32, #tpu.memory_space<vmem>>, vector<8x128xf32>,
      %cst_39 = arith.constant 0.000000e+00 : f32
      %52 = vector.broadcast %cst_39 : f32 to vector<8x128xf32>
      %c0_40 = arith.constant 0 : index
      %c0_41 = arith.constant 0 : index
      %53 = vector.load %arg10[%c0_40, %c0_41] : memref<8x128xf32, #tpu.memory_space<vmem>>, vector<8x128xf32>
      tpu.vector_store %arg10[%c0_40, %c0_41], %52 {strides = array<i32>} : memref<8x128xf32, #tpu.memory_space<vmem>>, vector<8x128xf32>,
    } else {
    }
    %c0 = arith.constant 0 : index
    %c0_1 = arith.constant 0 : index
    %3 = vector.load %arg1[%c0, %c0_1] : memref<128x128xbf16, #tpu.memory_space<vmem>>, vector<128x128xbf16>
    %4 = arith.extf %3 : vector<128x128xbf16> to vector<128x128xf32>
    %c0_2 = arith.constant 0 : index
    %c0_3 = arith.constant 0 : index
    %5 = vector.load %arg2[%c0_2, %c0_3] : memref<8x128xf32, #tpu.memory_space<vmem>>, vector<8x128xf32>
    %c0_4 = arith.constant 0 : index
    %c0_5 = arith.constant 0 : index
    %6 = vector.load %arg3[%c0_4, %c0_5] : memref<128x8xf32, #tpu.memory_space<vmem>>, vector<128x8xf32>
    %c0_6 = arith.constant 0 : index
    %c0_7 = arith.constant 0 : index
    %7 = vector.load %arg9[%c0_6, %c0_7] : memref<8x128xf32, #tpu.memory_space<vmem>>, vector<8x128xf32>
    %cst_8 = arith.constant dense<0.000000e+00> : vector<8x128xf32>
    %8 = tpu.matmul %5, %4, %cst_8 {dimension_numbers = #tpu.dot_dimension_numbers<[1], [0], [0], [1], [0, 0, 1, 1], [], []>} : vector<8x128xf32>, vector<128x128xf32>, vector<8x128xf32> -> vector<8x128xf32>
    %9 = arith.addf %7, %8 : vector<8x128xf32>
    %c0_9 = arith.constant 0 : index
    %c0_10 = arith.constant 0 : index
    %10 = vector.load %arg9[%c0_9, %c0_10] : memref<8x128xf32, #tpu.memory_space<vmem>>, vector<8x128xf32>
    tpu.vector_store %arg9[%c0_9, %c0_10], %9 {strides = array<i32>} : memref<8x128xf32, #tpu.memory_space<vmem>>, vector<8x128xf32>,
    %c0_11 = arith.constant 0 : index
    %c0_12 = arith.constant 0 : index
    %11 = vector.load %arg10[%c0_11, %c0_12] : memref<8x128xf32, #tpu.memory_space<vmem>>, vector<8x128xf32>
    %cst_13 = arith.constant dense<0.000000e+00> : vector<8xf32>
    %12 = vector.multi_reduction <add>, %5, %cst_13 [1] : vector<8x128xf32> to vector<8xf32>
    %13 = vector.shape_cast %12 : vector<8xf32> to vector<8x1xf32>
    %14 = vector.broadcast %13 : vector<8x1xf32> to vector<8x128xf32>
    %15 = arith.addf %11, %14 : vector<8x128xf32>
    %c0_14 = arith.constant 0 : index
    %c0_15 = arith.constant 0 : index
    %16 = vector.load %arg10[%c0_14, %c0_15] : memref<8x128xf32, #tpu.memory_space<vmem>>, vector<8x128xf32>
    tpu.vector_store %arg10[%c0_14, %c0_15], %15 {strides = array<i32>} : memref<8x128xf32, #tpu.memory_space<vmem>>, vector<8x128xf32>,
    %17 = vector.extract_strided_slice %6 {offsets = [0, 0], sizes = [128, 1], strides = [1, 1]} : vector<128x8xf32> to vector<128x1xf32>
    %cst_16 = arith.constant 0.000000e+00 : f32
    %18 = vector.broadcast %cst_16 : f32 to vector<128x1xf32>
    %19 = arith.cmpf ogt, %17, %18 : vector<128x1xf32>
    %cst_17 = arith.constant -3.000000e+38 : f32
    %20 = vector.shape_cast %19 : vector<128x1xi1> to vector<128x1xi1>
    %21 = vector.broadcast %20 : vector<128x1xi1> to vector<128x128xi1>
    %22 = vector.broadcast %cst_17 : f32 to vector<128x128xf32>
    %23 = arith.select %21, %4, %22 : vector<128x128xi1>, vector<128x128xf32>
    %cst_18 = arith.constant dense<0xFF800000> : vector<128xf32>
    %24 = vector.multi_reduction <maximumf>, %23, %cst_18 [0] : vector<128x128xf32> to vector<128xf32>
    %25 = vector.shape_cast %24 : vector<128xf32> to vector<1x128xf32>
    %26 = vector.extract_strided_slice %6 {offsets = [0, 1], sizes = [128, 1], strides = [1, 1]} : vector<128x8xf32> to vector<128x1xf32>
    %cst_19 = arith.constant 0.000000e+00 : f32
    %27 = vector.broadcast %cst_19 : f32 to vector<128x1xf32>
    %28 = arith.cmpf ogt, %26, %27 : vector<128x1xf32>
    %cst_20 = arith.constant -3.000000e+38 : f32
    %29 = vector.shape_cast %28 : vector<128x1xi1> to vector<128x1xi1>
    %30 = vector.broadcast %29 : vector<128x1xi1> to vector<128x128xi1>
    %31 = vector.broadcast %cst_20 : f32 to vector<128x128xf32>
    %32 = arith.select %30, %4, %31 : vector<128x128xi1>, vector<128x128xf32>
    %cst_21 = arith.constant dense<0xFF800000> : vector<128xf32>
    %33 = vector.multi_reduction <maximumf>, %32, %cst_21 [0] : vector<128x128xf32> to vector<128xf32>
    %34 = vector.shape_cast %33 : vector<128xf32> to vector<1x128xf32>
    %cst_22 = arith.constant -3.000000e+38 : f32
    %35 = vector.broadcast %cst_22 : f32 to vector<1x128xf32>
    %cst_23 = arith.constant -3.000000e+38 : f32
    %36 = vector.broadcast %cst_23 : f32 to vector<1x128xf32>
    %cst_24 = arith.constant -3.000000e+38 : f32
    %37 = vector.broadcast %cst_24 : f32 to vector<1x128xf32>
    %cst_25 = arith.constant -3.000000e+38 : f32
    %38 = vector.broadcast %cst_25 : f32 to vector<1x128xf32>
    %cst_26 = arith.constant -3.000000e+38 : f32
    %39 = vector.broadcast %cst_26 : f32 to vector<1x128xf32>
    %cst_27 = arith.constant -3.000000e+38 : f32
    %40 = vector.broadcast %cst_27 : f32 to vector<1x128xf32>
    %41 = tpu.concatenate %25, %34, %35, %36, %37, %38, %39, %40 in 0 : vector<1x128xf32>, vector<1x128xf32>, vector<1x128xf32>, vector<1x128xf32>, vector<1x128xf32>, vector<1x128xf32>, vector<1x128xf32>, vector<1x128xf32> -> vector<8x128xf32>
    %c0_28 = arith.constant 0 : index
    %c0_29 = arith.constant 0 : index
    %42 = vector.load %arg8[%c0_28, %c0_29] : memref<8x128xf32, #tpu.memory_space<vmem>>, vector<8x128xf32>
    %43 = arith.maximumf %42, %41 : vector<8x128xf32>
    %c0_30 = arith.constant 0 : index
    %c0_31 = arith.constant 0 : index
    %44 = vector.load %arg8[%c0_30, %c0_31] : memref<8x128xf32, #tpu.memory_space<vmem>>, vector<8x128xf32>
    tpu.vector_store %arg8[%c0_30, %c0_31], %43 {strides = array<i32>} : memref<8x128xf32, #tpu.memory_space<vmem>>, vector<8x128xf32>,
    %c0_i32_32 = arith.constant 0 : i32
    %45 = arith.cmpi eq, %arg0, %c0_i32_32 : i32
    %46 = arith.extui %45 : i1 to i32
    %c0_i32_33 = arith.constant 0 : i32
    %47 = arith.cmpi ne, %46, %c0_i32_33 : i32
    scf.if %47 {
      %c0_34 = arith.constant 0 : index
      %c0_35 = arith.constant 0 : index
      %48 = vector.load %arg10[%c0_34, %c0_35] : memref<8x128xf32, #tpu.memory_space<vmem>>, vector<8x128xf32>
      %cst_36 = arith.constant 1.000000e+00 : f32
      %49 = vector.broadcast %cst_36 : f32 to vector<8x128xf32>
      %50 = arith.maximumf %48, %49 : vector<8x128xf32>
      %51 = tpu.reciprocal %50 {approx = true} : vector<8x128xf32> -> vector<8x128xf32>
      %c0_37 = arith.constant 0 : index
      %c0_38 = arith.constant 0 : index
      %52 = vector.load %arg9[%c0_37, %c0_38] : memref<8x128xf32, #tpu.memory_space<vmem>>, vector<8x128xf32>
      %53 = arith.mulf %52, %51 : vector<8x128xf32>
      %cst_39 = arith.constant 0.000000e+00 : f32
      %54 = vector.broadcast %cst_39 : f32 to vector<8x128xf32>
      %55 = arith.cmpf ogt, %48, %54 : vector<8x128xf32>
      %c0_40 = arith.constant 0 : index
      %c0_41 = arith.constant 0 : index
      %56 = vector.load %arg8[%c0_40, %c0_41] : memref<8x128xf32, #tpu.memory_space<vmem>>, vector<8x128xf32>
      %cst_42 = arith.constant 0.000000e+00 : f32
      %57 = vector.broadcast %cst_42 : f32 to vector<8x128xf32>
      %58 = arith.select %55, %56, %57 : vector<8x128xi1>, vector<8x128xf32>
      %c0_43 = arith.constant 0 : index
      %c0_44 = arith.constant 0 : index
      %59 = vector.load %arg4[%c0_43, %c0_44] : memref<128x128xf32, #tpu.memory_space<vmem>>, vector<128x128xf32>
      %cst_45 = arith.constant dense<0.000000e+00> : vector<8x128xf32>
      %60 = tpu.matmul %58, %59, %cst_45 {dimension_numbers = #tpu.dot_dimension_numbers<[1], [0], [0], [1], [0, 0, 1, 1], [], []>} : vector<8x128xf32>, vector<128x128xf32>, vector<8x128xf32> -> vector<8x128xf32>
      %c0_46 = arith.constant 0 : index
      %c0_47 = arith.constant 0 : index
      %61 = vector.load %arg5[%c0_46, %c0_47] : memref<128x128xf32, #tpu.memory_space<vmem>>, vector<128x128xf32>
      %cst_48 = arith.constant dense<0.000000e+00> : vector<8x128xf32>
      %62 = tpu.matmul %53, %61, %cst_48 {dimension_numbers = #tpu.dot_dimension_numbers<[1], [0], [0], [1], [0, 0, 1, 1], [], []>} : vector<8x128xf32>, vector<128x128xf32>, vector<8x128xf32> -> vector<8x128xf32>
      %63 = arith.addf %60, %62 : vector<8x128xf32>
      %c0_49 = arith.constant 0 : index
      %c0_50 = arith.constant 0 : index
      %64 = vector.load %arg6[%c0_49, %c0_50] : memref<1x128xf32, #tpu.memory_space<vmem>>, vector<1x128xf32>
      %65 = vector.broadcast %64 : vector<1x128xf32> to vector<8x128xf32>
      %66 = arith.addf %63, %65 : vector<8x128xf32>
      %c0_51 = arith.constant 0 : index
      %c0_52 = arith.constant 0 : index
      %67 = vector.load %arg7[%c0_51, %c0_52] : memref<8x128xf32, #tpu.memory_space<vmem>>, vector<8x128xf32>
      tpu.vector_store %arg7[%c0_51, %c0_52], %66 {strides = array<i32>} : memref<8x128xf32, #tpu.memory_space<vmem>>, vector<8x128xf32>,
    } else {
    }
    return
  }
  func.func @transform_0(%arg0: i32) -> (i32, i32) {
    %c0_i32 = arith.constant 0 : i32
    %c0_i32_0 = arith.constant 0 : i32
    return %arg0, %c0_i32 : i32, i32
  }
  func.func @transform_1(%arg0: i32) -> (i32, i32) {
    %c0_i32 = arith.constant 0 : i32
    %c0_i32_0 = arith.constant 0 : i32
    return %c0_i32, %arg0 : i32, i32
  }
  func.func @transform_2(%arg0: i32) -> (i32, i32) {
    %c0_i32 = arith.constant 0 : i32
    %c0_i32_0 = arith.constant 0 : i32
    return %arg0, %c0_i32 : i32, i32
  }
  func.func @transform_3(%arg0: i32) -> (i32, i32) {
    %c0_i32 = arith.constant 0 : i32
    %c0_i32_0 = arith.constant 0 : i32
    %c0_i32_1 = arith.constant 0 : i32
    return %c0_i32, %c0_i32_0 : i32, i32
  }
  func.func @transform_4(%arg0: i32) -> (i32, i32) {
    %c0_i32 = arith.constant 0 : i32
    %c0_i32_0 = arith.constant 0 : i32
    %c0_i32_1 = arith.constant 0 : i32
    return %c0_i32, %c0_i32_0 : i32, i32
  }
  func.func @transform_5(%arg0: i32) -> (i32, i32) {
    %c0_i32 = arith.constant 0 : i32
    %c0_i32_0 = arith.constant 0 : i32
    %c0_i32_1 = arith.constant 0 : i32
    return %c0_i32, %c0_i32_0 : i32, i32
  }
  func.func @transform_6(%arg0: i32) -> (i32, i32) {
    %c0_i32 = arith.constant 0 : i32
    %c0_i32_0 = arith.constant 0 : i32
    %c0_i32_1 = arith.constant 0 : i32
    return %c0_i32, %c0_i32_0 : i32, i32
  }
}

</mosaic_0001>

<llo_original>
// kernel: gcn_forward.2
$region0: #{gcn_forward.2}
  #allocation0 [shape = 'u32[]', space=smem, size = 0x4, offset = 0x4, fixed_abs, tag = 'smem constant byte address 0x4 - core index']
  #allocation1 [shape = 'u32[144,128]{1,0:T(1,128)}', space=vmem, size = 0x12000, scoped, tag = 'internal scratch']
  %s0 = inlined_call_operand.vmem [shape: bf16[128,128], index: 0, kind: input, shape index: {}]
  %s1 = inlined_call_operand.vmem [shape: bf16[128,128], index: 1, kind: input, shape index: {}]
  %s2 = inlined_call_operand.vmem [shape: bf16[128,128], index: 2, kind: input, shape index: {}]
  %s3 = inlined_call_operand.vmem [shape: f32[1,128], index: 3, kind: input, shape index: {}]
  %s4 = inlined_call_operand.vmem [shape: bf16[128,128], index: 4, kind: input, shape index: {}]
  %s5 = inlined_call_operand.vmem [shape: f32[1,128], index: 5, kind: input, shape index: {}]
  %s6 = inlined_call_operand.vmem [shape: bf16[128,128], index: 6, kind: output, shape index: {}]
  %s7 = sld [smem:[#allocation0]]
  $region34: #{gcn_forward.2} parent=0
    _
  %s9 = ssub.s32 1, %s7
  %s10 = scalar_select 0, %s9, %s7
  // Predicated region
  $region2: #{gcn_forward.2} parent=0 // pred_check
    _
  $region3: #{gcn_forward.2} parent=0 // pred_check_branch
    %12 = sbr.rel (0) target = $region5
  $region4: #{gcn_forward.2} parent=0 // pred_region
    _
  $region5: #{gcn_forward.2} parent=0 // pred_fallthru
    _
  // Predicated region
  $region6: #{gcn_forward.2} parent=0 // pred_check
    _
  $region7: #{gcn_forward.2} parent=0 // pred_check_branch
    %14 = sbr.rel (0) target = $region9
  $region8: #{gcn_forward.2} parent=0 // pred_region
    _
  $region9: #{gcn_forward.2} parent=0 // pred_fallthru
    _
  // Predicated region
  $region10: #{gcn_forward.2} parent=0 // pred_check
    _
  $region11: #{gcn_forward.2} parent=0 // pred_check_branch
    %16 = sbr.rel (0) target = $region13
  $region12: #{gcn_forward.2} parent=0 // pred_region
    _
  $region13: #{gcn_forward.2} parent=0 // pred_fallthru
    _
  // Predicated region
  $region14: #{gcn_forward.2} parent=0 // pred_check
    _
  $region15: #{gcn_forward.2} parent=0 // pred_check_branch
    %18 = sbr.rel (0) target = $region17
  $region16: #{gcn_forward.2} parent=0 // pred_region
    _
  $region17: #{gcn_forward.2} parent=0 // pred_fallthru
    _
  // Predicated region
  $region18: #{gcn_forward.2} parent=0 // pred_check
    _
  $region19: #{gcn_forward.2} parent=0 // pred_check_branch
    %20 = sbr.rel (0) target = $region21
  $region20: #{gcn_forward.2} parent=0 // pred_region
    _
  $region21: #{gcn_forward.2} parent=0 // pred_fallthru
    _
  // Predicated region
  $region22: #{gcn_forward.2} parent=0 // pred_check
    _
  $region23: #{gcn_forward.2} parent=0 // pred_check_branch
    %22 = sbr.rel (0) target = $region25
  $region24: #{gcn_forward.2} parent=0 // pred_region
    _
  $region25: #{gcn_forward.2} parent=0 // pred_fallthru
    _
  %v24 = vld [vmem:[%s1] sm:$0xf]
  %v25 = vld [vmem:[%s1 + $0x4] sm:$0xf]
  %v26 = vld [vmem:[%s1 + $0x8] sm:$0xf]
  %v27 = vld [vmem:[%s1 + $0xc] sm:$0xf]
  %v28 = vld [vmem:[%s1 + $0x10] sm:$0xf]
  %v29 = vld [vmem:[%s1 + $0x14] sm:$0xf]
  %v30 = vld [vmem:[%s1 + $0x18] sm:$0xf]
  %v31 = vld [vmem:[%s1 + $0x1c] sm:$0xf]
  %v32 = vld [vmem:[%s1 + $0x20] sm:$0xf]
  %v33 = vld [vmem:[%s1 + $0x24] sm:$0xf]
  %v34 = vld [vmem:[%s1 + $0x28] sm:$0xf]
  %v35 = vld [vmem:[%s1 + $0x2c] sm:$0xf]
  %v36 = vld [vmem:[%s1 + $0x30] sm:$0xf]
  %v37 = vld [vmem:[%s1 + $0x34] sm:$0xf]
  %v38 = vld [vmem:[%s1 + $0x38] sm:$0xf]
  %v39 = vld [vmem:[%s1 + $0x3c] sm:$0xf]
  %v40 = vld [vmem:[%s2] sm:$0xf]
  %v41 = vld [vmem:[%s2 + $0x4] sm:$0xf]
  %v42 = vld [vmem:[%s2 + $0x8] sm:$0xf]
  %v43 = vld [vmem:[%s2 + $0xc] sm:$0xf]
  %v44 = vld [vmem:[%s2 + $0x10] sm:$0xf]
  %v45 = vld [vmem:[%s2 + $0x14] sm:$0xf]
  %v46 = vld [vmem:[%s2 + $0x18] sm:$0xf]
  %v47 = vld [vmem:[%s2 + $0x1c] sm:$0xf]
  %v48 = vld [vmem:[%s2 + $0x20] sm:$0xf]
  %v49 = vld [vmem:[%s2 + $0x24] sm:$0xf]
  %v50 = vld [vmem:[%s2 + $0x28] sm:$0xf]
  %v51 = vld [vmem:[%s2 + $0x2c] sm:$0xf]
  %v52 = vld [vmem:[%s2 + $0x30] sm:$0xf]
  %v53 = vld [vmem:[%s2 + $0x34] sm:$0xf]
  %v54 = vld [vmem:[%s2 + $0x38] sm:$0xf]
  %v55 = vld [vmem:[%s2 + $0x3c] sm:$0xf]
  %v72 = vunpack.c.l.b16 %v24
  %v73 = vunpack.c.l.b16 %v25
  %v74 = vunpack.c.l.b16 %v26
  %v75 = vunpack.c.l.b16 %v27
  %v76 = vunpack.c.l.b16 %v28
  %v77 = vunpack.c.l.b16 %v29
  %v78 = vunpack.c.l.b16 %v30
  %v79 = vunpack.c.l.b16 %v31
  %v80 = vunpack.c.l.b16 %v32
  %v81 = vunpack.c.l.b16 %v33
  %v82 = vunpack.c.l.b16 %v34
  %v83 = vunpack.c.l.b16 %v35
  %v84 = vunpack.c.l.b16 %v36
  %v85 = vunpack.c.l.b16 %v37
  %v86 = vunpack.c.l.b16 %v38
  %v87 = vunpack.c.l.b16 %v39
  %v88 = vpack.c.b16 %v73, %v72
  %v89 = vpack.c.b16 %v75, %v74
  %v90 = vpack.c.b16 %v77, %v76
  %v91 = vpack.c.b16 %v79, %v78
  %v92 = vpack.c.b16 %v81, %v80
  %v93 = vpack.c.b16 %v83, %v82
  %v94 = vpack.c.b16 %v85, %v84
  %v95 = vpack.c.b16 %v87, %v86
  %v120 = vunpack.c.l.b16 %v40
  %v121 = vunpack.c.l.b16 %v41
  %v122 = vunpack.c.l.b16 %v42
  %v123 = vunpack.c.l.b16 %v43
  %v124 = vunpack.c.l.b16 %v44
  %v125 = vunpack.c.l.b16 %v45
  %v126 = vunpack.c.l.b16 %v46
  %v127 = vunpack.c.l.b16 %v47
  %v128 = vunpack.c.l.b16 %v48
  %v129 = vunpack.c.l.b16 %v49
  %v130 = vunpack.c.l.b16 %v50
  %v131 = vunpack.c.l.b16 %v51
  %v132 = vunpack.c.l.b16 %v52
  %v133 = vunpack.c.l.b16 %v53
  %v134 = vunpack.c.l.b16 %v54
  %v135 = vunpack.c.l.b16 %v55
  %v136 = vpack.c.b16 %v121, %v120
  %v137 = vpack.c.b16 %v123, %v122
  %v138 = vpack.c.b16 %v125, %v124
  %v139 = vpack.c.b16 %v127, %v126
  %v140 = vpack.c.b16 %v129, %v128
  %v141 = vpack.c.b16 %v131, %v130
  %v142 = vpack.c.b16 %v133, %v132
  %v143 = vpack.c.b16 %v135, %v134
  %152 = vmatprep.subr.bf16.mxu0 0
  %153 = vmatpush1.bf16.msra.mxu0 %v143
  %154 = vmatprep.subr.bf16.mxu0 0
  %155 = vmatpush1.bf16.msra.mxu0 %v142
  %156 = vmatprep.subr.bf16.mxu0 0
  %157 = vmatpush1.bf16.msra.mxu0 %v141
  %158 = vmatprep.subr.bf16.mxu0 0
  %159 = vmatpush1.bf16.msra.mxu0 %v140
  %160 = vmatprep.subr.bf16.mxu0 0
  %161 = vmatpush1.bf16.msra.mxu0 %v139
  %162 = vmatprep.subr.bf16.mxu0 0
  %163 = vmatpush1.bf16.msra.mxu0 %v138
  %164 = vmatprep.subr.bf16.mxu0 0
  %165 = vmatpush1.bf16.msra.mxu0 %v137
  %166 = vmatprep.subr.bf16.mxu0 0
  %167 = vmatpush1.bf16.msra.mxu0 %v136
  %168 = vmatprep.subr.bf16.mxu0 0
  %169 = vmatpush2.bf16.msra.mxu0 0
  %170 = vmatprep.subr.bf16.mxu0 0
  %171 = vmatpush2.bf16.msra.mxu0 0
  %172 = vmatprep.subr.bf16.mxu0 0
  %173 = vmatpush2.bf16.msra.mxu0 0
  %174 = vmatprep.subr.bf16.mxu0 0
  %175 = vmatpush2.bf16.msra.mxu0 0
  %176 = vmatprep.subr.bf16.mxu0 0
  %177 = vmatpush2.bf16.msra.mxu0 0
  %178 = vmatprep.subr.bf16.mxu0 0
  %179 = vmatpush2.bf16.msra.mxu0 0
  %180 = vmatprep.subr.bf16.mxu0 0
  %181 = vmatpush2.bf16.msra.mxu0 0
  %182 = vmatprep.subr.bf16.mxu0 0
  %183 = vmatpush2.bf16.msra.mxu0 0
  %184 = vmatprep.mubr.bf16.mxu0 0
  %185 = vmatmul.mubr.bf16.gmra.mxu0 %v88
  %v186 = vpop.f32.mrf.mxu0
  %v187 = vadd.f32 0.0, %v186
  %v188 = vpop.f32.mrf.mxu0
  %v189 = vpop.f32.mrf.mxu0
  %v190 = vadd.f32 0.0, %v189
  %v191 = vpop.f32.mrf.mxu0
  %192 = vmatprep.mubr.bf16.mxu0 0
  %193 = vmatmul.mubr.bf16.gmra.mxu0 %v89
  %v194 = vpop.f32.mrf.mxu0
  %v195 = vadd.f32 0.0, %v194
  %v196 = vpop.f32.mrf.mxu0
  %v197 = vpop.f32.mrf.mxu0
  %v198 = vadd.f32 0.0, %v197
  %v199 = vpop.f32.mrf.mxu0
  %200 = vmatprep.mubr.bf16.mxu0 0
  %201 = vmatmul.mubr.bf16.gmra.mxu0 %v90
  %v202 = vpop.f32.mrf.mxu0
  %v203 = vadd.f32 0.0, %v202
  %v204 = vpop.f32.mrf.mxu0
  %v205 = vpop.f32.mrf.mxu0
  %v206 = vadd.f32 0.0, %v205
  %v207 = vpop.f32.mrf.mxu0
  %208 = vmatprep.mubr.bf16.mxu0 0
  %209 = vmatmul.mubr.bf16.gmra.mxu0 %v91
  %v210 = vpop.f32.mrf.mxu0
  %v211 = vadd.f32 0.0, %v210
  %v212 = vpop.f32.mrf.mxu0
  %v213 = vpop.f32.mrf.mxu0
  %v214 = vadd.f32 0.0, %v213
  %v215 = vpop.f32.mrf.mxu0
  %216 = vmatprep.mubr.bf16.mxu0 0
  %217 = vmatmul.mubr.bf16.gmra.mxu0 %v92
  %v218 = vpop.f32.mrf.mxu0
  %v219 = vadd.f32 0.0, %v218
  %v220 = vpop.f32.mrf.mxu0
  %v221 = vpop.f32.mrf.mxu0
  %v222 = vadd.f32 0.0, %v221
  %v223 = vpop.f32.mrf.mxu0
  %224 = vmatprep.mubr.bf16.mxu0 0
  %225 = vmatmul.mubr.bf16.gmra.mxu0 %v93
  %v226 = vpop.f32.mrf.mxu0
  %v227 = vadd.f32 0.0, %v226
  %v228 = vpop.f32.mrf.mxu0
  %v229 = vpop.f32.mrf.mxu0
  %v230 = vadd.f32 0.0, %v229
  %v231 = vpop.f32.mrf.mxu0
  %232 = vmatprep.mubr.bf16.mxu0 0
  %233 = vmatmul.mubr.bf16.gmra.mxu0 %v94
  %v234 = vpop.f32.mrf.mxu0
  %v235 = vadd.f32 0.0, %v234
  %v236 = vpop.f32.mrf.mxu0
  %v237 = vpop.f32.mrf.mxu0
  %v238 = vadd.f32 0.0, %v237
  %v239 = vpop.f32.mrf.mxu0
  %240 = vmatprep.mubr.bf16.mxu0 0
  %241 = vmatmul.mubr.bf16.gmra.mxu0 %v95
  %v242 = vpop.f32.mrf.mxu0
  %v243 = vadd.f32 0.0, %v242
  %v244 = vpop.f32.mrf.mxu0
  %v245 = vpop.f32.mrf.mxu0
  %v246 = vadd.f32 0.0, %v245
  %v247 = vpop.f32.mrf.mxu0
  %248 = vdwg.mxu0
  %v249 = vpack.c.bf16 %v190, %v187
  %v250 = vpack.c.bf16 %v198, %v195
  %v251 = vpack.c.bf16 %v206, %v203
  %v252 = vpack.c.bf16 %v214, %v211
  %v253 = vpack.c.bf16 %v222, %v219
  %v254 = vpack.c.bf16 %v230, %v227
  %v255 = vpack.c.bf16 %v238, %v235
  %v256 = vpack.c.bf16 %v246, %v243
  %v257 = vld [vmem:[%s0] sm:$0xf]
  %v258 = vld [vmem:[%s0 + $0x4] sm:$0xf]
  %v259 = vld [vmem:[%s0 + $0x8] sm:$0xf]
  %v260 = vld [vmem:[%s0 + $0xc] sm:$0xf]
  %v261 = vld [vmem:[%s0 + $0x10] sm:$0xf]
  %v262 = vld [vmem:[%s0 + $0x14] sm:$0xf]
  %v263 = vld [vmem:[%s0 + $0x18] sm:$0xf]
  %v264 = vld [vmem:[%s0 + $0x1c] sm:$0xf]
  %v265 = vld [vmem:[%s0 + $0x20] sm:$0xf]
  %v266 = vld [vmem:[%s0 + $0x24] sm:$0xf]
  %v267 = vld [vmem:[%s0 + $0x28] sm:$0xf]
  %v268 = vld [vmem:[%s0 + $0x2c] sm:$0xf]
  %v269 = vld [vmem:[%s0 + $0x30] sm:$0xf]
  %v270 = vld [vmem:[%s0 + $0x34] sm:$0xf]
  %v271 = vld [vmem:[%s0 + $0x38] sm:$0xf]
  %v272 = vld [vmem:[%s0 + $0x3c] sm:$0xf]
  %v273 = vld [vmem:[%s3] sm:$0x1]
  %v275 = vlaneseq
  %v276 = vshrl.u32 %v275, 7
  %v277 = vsub.s32 0, %v276
  %v278 = vrot.slane %v273, %v277
  %v296 = vunpack.c.l.b16 %v257
  %v297 = vunpack.c.l.b16 %v258
  %v298 = vunpack.c.l.b16 %v259
  %v299 = vunpack.c.l.b16 %v260
  %v300 = vunpack.c.l.b16 %v261
  %v301 = vunpack.c.l.b16 %v262
  %v302 = vunpack.c.l.b16 %v263
  %v303 = vunpack.c.l.b16 %v264
  %v304 = vunpack.c.l.b16 %v265
  %v305 = vunpack.c.l.b16 %v266
  %v306 = vunpack.c.l.b16 %v267
  %v307 = vunpack.c.l.b16 %v268
  %v308 = vunpack.c.l.b16 %v269
  %v309 = vunpack.c.l.b16 %v270
  %v310 = vunpack.c.l.b16 %v271
  %v311 = vunpack.c.l.b16 %v272
  %v312 = vpack.c.b16 %v297, %v296
  %v313 = vpack.c.b16 %v299, %v298
  %v314 = vpack.c.b16 %v301, %v300
  %v315 = vpack.c.b16 %v303, %v302
  %v316 = vpack.c.b16 %v305, %v304
  %v317 = vpack.c.b16 %v307, %v306
  %v318 = vpack.c.b16 %v309, %v308
  %v319 = vpack.c.b16 %v311, %v310
  %328 = vmatprep.subr.bf16.mxu0 0
  %329 = vmatpush1.bf16.msra.mxu0 %v256
  %330 = vmatprep.subr.bf16.mxu0 0
  %331 = vmatpush1.bf16.msra.mxu0 %v255
  %332 = vmatprep.subr.bf16.mxu0 0
  %333 = vmatpush1.bf16.msra.mxu0 %v254
  %334 = vmatprep.subr.bf16.mxu0 0
  %335 = vmatpush1.bf16.msra.mxu0 %v253
  %336 = vmatprep.subr.bf16.mxu0 0
  %337 = vmatpush1.bf16.msra.mxu0 %v252
  %338 = vmatprep.subr.bf16.mxu0 0
  %339 = vmatpush1.bf16.msra.mxu0 %v251
  %340 = vmatprep.subr.bf16.mxu0 0
  %341 = vmatpush1.bf16.msra.mxu0 %v250
  %342 = vmatprep.subr.bf16.mxu0 0
  %343 = vmatpush1.bf16.msra.mxu0 %v249
  %344 = vmatprep.subr.bf16.mxu0 0
  %345 = vmatpush2.bf16.msra.mxu0 0
  %346 = vmatprep.subr.bf16.mxu0 0
  %347 = vmatpush2.bf16.msra.mxu0 0
  %348 = vmatprep.subr.bf16.mxu0 0
  %349 = vmatpush2.bf16.msra.mxu0 0
  %350 = vmatprep.subr.bf16.mxu0 0
  %351 = vmatpush2.bf16.msra.mxu0 0
  %352 = vmatprep.subr.bf16.mxu0 0
  %353 = vmatpush2.bf16.msra.mxu0 0
  %354 = vmatprep.subr.bf16.mxu0 0
  %355 = vmatpush2.bf16.msra.mxu0 0
  %356 = vmatprep.subr.bf16.mxu0 0
  %357 = vmatpush2.bf16.msra.mxu0 0
  %358 = vmatprep.subr.bf16.mxu0 0
  %359 = vmatpush2.bf16.msra.mxu0 0
  %360 = vmatprep.mubr.bf16.mxu0 0
  %361 = vmatmul.mubr.bf16.gmra.mxu0 %v312
  %v362 = vpop.f32.mrf.mxu0
  %v363 = vadd.f32 %v278, %v362
  %v364 = vpop.f32.mrf.mxu0
  %v365 = vpop.f32.mrf.mxu0
  %v366 = vadd.f32 %v278, %v365
  %v367 = vpop.f32.mrf.mxu0
  %368 = vmatprep.mubr.bf16.mxu0 0
  %369 = vmatmul.mubr.bf16.gmra.mxu0 %v313
  %v370 = vpop.f32.mrf.mxu0
  %v371 = vadd.f32 %v278, %v370
  %v372 = vpop.f32.mrf.mxu0
  %v373 = vpop.f32.mrf.mxu0
  %v374 = vadd.f32 %v278, %v373
  %v375 = vpop.f32.mrf.mxu0
  %376 = vmatprep.mubr.bf16.mxu0 0
  %377 = vmatmul.mubr.bf16.gmra.mxu0 %v314
  %v378 = vpop.f32.mrf.mxu0
  %v379 = vadd.f32 %v278, %v378
  %v380 = vpop.f32.mrf.mxu0
  %v381 = vpop.f32.mrf.mxu0
  %v382 = vadd.f32 %v278, %v381
  %v383 = vpop.f32.mrf.mxu0
  %384 = vmatprep.mubr.bf16.mxu0 0
  %385 = vmatmul.mubr.bf16.gmra.mxu0 %v315
  %v386 = vpop.f32.mrf.mxu0
  %v387 = vadd.f32 %v278, %v386
  %v388 = vpop.f32.mrf.mxu0
  %v389 = vpop.f32.mrf.mxu0
  %v390 = vadd.f32 %v278, %v389
  %v391 = vpop.f32.mrf.mxu0
  %392 = vmatprep.mubr.bf16.mxu0 0
  %393 = vmatmul.mubr.bf16.gmra.mxu0 %v316
  %v394 = vpop.f32.mrf.mxu0
  %v395 = vadd.f32 %v278, %v394
  %v396 = vpop.f32.mrf.mxu0
  %v397 = vpop.f32.mrf.mxu0
  %v398 = vadd.f32 %v278, %v397
  %v399 = vpop.f32.mrf.mxu0
  %400 = vmatprep.mubr.bf16.mxu0 0
  %401 = vmatmul.mubr.bf16.gmra.mxu0 %v317
  %v402 = vpop.f32.mrf.mxu0
  %v403 = vadd.f32 %v278, %v402
  %v404 = vpop.f32.mrf.mxu0
  %v405 = vpop.f32.mrf.mxu0
  %v406 = vadd.f32 %v278, %v405
  %v407 = vpop.f32.mrf.mxu0
  %408 = vmatprep.mubr.bf16.mxu0 0
  %409 = vmatmul.mubr.bf16.gmra.mxu0 %v318
  %v410 = vpop.f32.mrf.mxu0
  %v411 = vadd.f32 %v278, %v410
  %v412 = vpop.f32.mrf.mxu0
  %v413 = vpop.f32.mrf.mxu0
  %v414 = vadd.f32 %v278, %v413
  %v415 = vpop.f32.mrf.mxu0
  %416 = vmatprep.mubr.bf16.mxu0 0
  %417 = vmatmul.mubr.bf16.gmra.mxu0 %v319
  %v418 = vpop.f32.mrf.mxu0
  %v419 = vadd.f32 %v278, %v418
  %v420 = vpop.f32.mrf.mxu0
  %v421 = vpop.f32.mrf.mxu0
  %v422 = vadd.f32 %v278, %v421
  %v423 = vpop.f32.mrf.mxu0
  %424 = vdwg.mxu0
  %v425 = vmax.f32 %v363, 0.0
  %v426 = vmax.f32 %v366, 0.0
  %v427 = vmax.f32 %v371, 0.0
  %v428 = vmax.f32 %v374, 0.0
  %v429 = vmax.f32 %v379, 0.0
  %v430 = vmax.f32 %v382, 0.0
  %v431 = vmax.f32 %v387, 0.0
  %v432 = vmax.f32 %v390, 0.0
  %v433 = vmax.f32 %v395, 0.0
  %v434 = vmax.f32 %v398, 0.0
  %v435 = vmax.f32 %v403, 0.0
  %v436 = vmax.f32 %v406, 0.0
  %v437 = vmax.f32 %v411, 0.0
  %v438 = vmax.f32 %v414, 0.0
  %v439 = vmax.f32 %v419, 0.0
  %v440 = vmax.f32 %v422, 0.0
  %v441 = vpack.c.bf16 %v426, %v425
  %v442 = vpack.c.bf16 %v428, %v427
  %v443 = vpack.c.bf16 %v430, %v429
  %v444 = vpack.c.bf16 %v432, %v431
  %v445 = vpack.c.bf16 %v434, %v433
  %v446 = vpack.c.bf16 %v436, %v435
  %v447 = vpack.c.bf16 %v438, %v437
  %v448 = vpack.c.bf16 %v440, %v439
  %v449 = vld [vmem:[%s4] sm:$0xf]
  %v450 = vld [vmem:[%s4 + $0x4] sm:$0xf]
  %v451 = vld [vmem:[%s4 + $0x8] sm:$0xf]
  %v452 = vld [vmem:[%s4 + $0xc] sm:$0xf]
  %v453 = vld [vmem:[%s4 + $0x10] sm:$0xf]
  %v454 = vld [vmem:[%s4 + $0x14] sm:$0xf]
  %v455 = vld [vmem:[%s4 + $0x18] sm:$0xf]
  %v456 = vld [vmem:[%s4 + $0x1c] sm:$0xf]
  %v457 = vld [vmem:[%s4 + $0x20] sm:$0xf]
  %v458 = vld [vmem:[%s4 + $0x24] sm:$0xf]
  %v459 = vld [vmem:[%s4 + $0x28] sm:$0xf]
  %v460 = vld [vmem:[%s4 + $0x2c] sm:$0xf]
  %v461 = vld [vmem:[%s4 + $0x30] sm:$0xf]
  %v462 = vld [vmem:[%s4 + $0x34] sm:$0xf]
  %v463 = vld [vmem:[%s4 + $0x38] sm:$0xf]
  %v464 = vld [vmem:[%s4 + $0x3c] sm:$0xf]
  %v481 = vunpack.c.l.b16 %v449
  %v482 = vunpack.c.l.b16 %v450
  %v483 = vunpack.c.l.b16 %v451
  %v484 = vunpack.c.l.b16 %v452
  %v485 = vunpack.c.l.b16 %v453
  %v486 = vunpack.c.l.b16 %v454
  %v487 = vunpack.c.l.b16 %v455
  %v488 = vunpack.c.l.b16 %v456
  %v489 = vunpack.c.l.b16 %v457
  %v490 = vunpack.c.l.b16 %v458
  %v491 = vunpack.c.l.b16 %v459
  %v492 = vunpack.c.l.b16 %v460
  %v493 = vunpack.c.l.b16 %v461
  %v494 = vunpack.c.l.b16 %v462
  %v495 = vunpack.c.l.b16 %v463
  %v496 = vunpack.c.l.b16 %v464
  %v497 = vpack.c.b16 %v482, %v481
  %v498 = vpack.c.b16 %v484, %v483
  %v499 = vpack.c.b16 %v486, %v485
  %v500 = vpack.c.b16 %v488, %v487
  %v501 = vpack.c.b16 %v490, %v489
  %v502 = vpack.c.b16 %v492, %v491
  %v503 = vpack.c.b16 %v494, %v493
  %v504 = vpack.c.b16 %v496, %v495
  %513 = vmatprep.subr.bf16.mxu0 0
  %514 = vmatpush1.bf16.msra.mxu0 %v504
  %515 = vmatprep.subr.bf16.mxu0 0
  %516 = vmatpush1.bf16.msra.mxu0 %v503
  %517 = vmatprep.subr.bf16.mxu0 0
  %518 = vmatpush1.bf16.msra.mxu0 %v502
  %519 = vmatprep.subr.bf16.mxu0 0
  %520 = vmatpush1.bf16.msra.mxu0 %v501
  %521 = vmatprep.subr.bf16.mxu0 0
  %522 = vmatpush1.bf16.msra.mxu0 %v500
  %523 = vmatprep.subr.bf16.mxu0 0
  %524 = vmatpush1.bf16.msra.mxu0 %v499
  %525 = vmatprep.subr.bf16.mxu0 0
  %526 = vmatpush1.bf16.msra.mxu0 %v498
  %527 = vmatprep.subr.bf16.mxu0 0
  %528 = vmatpush1.bf16.msra.mxu0 %v497
  %529 = vmatprep.subr.bf16.mxu0 0
  %530 = vmatpush2.bf16.msra.mxu0 0
  %531 = vmatprep.subr.bf16.mxu0 0
  %532 = vmatpush2.bf16.msra.mxu0 0
  %533 = vmatprep.subr.bf16.mxu0 0
  %534 = vmatpush2.bf16.msra.mxu0 0
  %535 = vmatprep.subr.bf16.mxu0 0
  %536 = vmatpush2.bf16.msra.mxu0 0
  %537 = vmatprep.subr.bf16.mxu0 0
  %538 = vmatpush2.bf16.msra.mxu0 0
  %539 = vmatprep.subr.bf16.mxu0 0
  %540 = vmatpush2.bf16.msra.mxu0 0
  %541 = vmatprep.subr.bf16.mxu0 0
  %542 = vmatpush2.bf16.msra.mxu0 0
  %543 = vmatprep.subr.bf16.mxu0 0
  %544 = vmatpush2.bf16.msra.mxu0 0
  %545 = vmatprep.mubr.bf16.mxu0 0
  %546 = vmatmul.mubr.bf16.gmra.mxu0 %v441
  %v547 = vpop.f32.mrf.mxu0
  %v548 = vadd.f32 0.0, %v547
  %v549 = vpop.f32.mrf.mxu0
  %v550 = vpop.f32.mrf.mxu0
  %v551 = vadd.f32 0.0, %v550
  %v552 = vpop.f32.mrf.mxu0
  %553 = vmatprep.mubr.bf16.mxu0 0
  %554 = vmatmul.mubr.bf16.gmra.mxu0 %v442
  %v555 = vpop.f32.mrf.mxu0
  %v556 = vadd.f32 0.0, %v555
  %v557 = vpop.f32.mrf.mxu0
  %v558 = vpop.f32.mrf.mxu0
  %v559 = vadd.f32 0.0, %v558
  %v560 = vpop.f32.mrf.mxu0
  %561 = vmatprep.mubr.bf16.mxu0 0
  %562 = vmatmul.mubr.bf16.gmra.mxu0 %v443
  %v563 = vpop.f32.mrf.mxu0
  %v564 = vadd.f32 0.0, %v563
  %v565 = vpop.f32.mrf.mxu0
  %v566 = vpop.f32.mrf.mxu0
  %v567 = vadd.f32 0.0, %v566
  %v568 = vpop.f32.mrf.mxu0
  %569 = vmatprep.mubr.bf16.mxu0 0
  %570 = vmatmul.mubr.bf16.gmra.mxu0 %v444
  %v571 = vpop.f32.mrf.mxu0
  %v572 = vadd.f32 0.0, %v571
  %v573 = vpop.f32.mrf.mxu0
  %v574 = vpop.f32.mrf.mxu0
  %v575 = vadd.f32 0.0, %v574
  %v576 = vpop.f32.mrf.mxu0
  %577 = vmatprep.mubr.bf16.mxu0 0
  %578 = vmatmul.mubr.bf16.gmra.mxu0 %v445
  %v579 = vpop.f32.mrf.mxu0
  %v580 = vadd.f32 0.0, %v579
  %v581 = vpop.f32.mrf.mxu0
  %v582 = vpop.f32.mrf.mxu0
  %v583 = vadd.f32 0.0, %v582
  %v584 = vpop.f32.mrf.mxu0
  %585 = vmatprep.mubr.bf16.mxu0 0
  %586 = vmatmul.mubr.bf16.gmra.mxu0 %v446
  %v587 = vpop.f32.mrf.mxu0
  %v588 = vadd.f32 0.0, %v587
  %v589 = vpop.f32.mrf.mxu0
  %v590 = vpop.f32.mrf.mxu0
  %v591 = vadd.f32 0.0, %v590
  %v592 = vpop.f32.mrf.mxu0
  %593 = vmatprep.mubr.bf16.mxu0 0
  %594 = vmatmul.mubr.bf16.gmra.mxu0 %v447
  %v595 = vpop.f32.mrf.mxu0
  %v596 = vadd.f32 0.0, %v595
  %v597 = vpop.f32.mrf.mxu0
  %v598 = vpop.f32.mrf.mxu0
  %v599 = vadd.f32 0.0, %v598
  %v600 = vpop.f32.mrf.mxu0
  %601 = vmatprep.mubr.bf16.mxu0 0
  %602 = vmatmul.mubr.bf16.gmra.mxu0 %v448
  %v603 = vpop.f32.mrf.mxu0
  %v604 = vadd.f32 0.0, %v603
  %v605 = vpop.f32.mrf.mxu0
  %v606 = vpop.f32.mrf.mxu0
  %v607 = vadd.f32 0.0, %v606
  %v608 = vpop.f32.mrf.mxu0
  %609 = vdwg.mxu0
  %v610 = vpack.c.bf16 %v551, %v548
  %v611 = vpack.c.bf16 %v559, %v556
  %v612 = vpack.c.bf16 %v567, %v564
  %v613 = vpack.c.bf16 %v575, %v572
  %v614 = vpack.c.bf16 %v583, %v580
  %v615 = vpack.c.bf16 %v591, %v588
  %v616 = vpack.c.bf16 %v599, %v596
  %v617 = vpack.c.bf16 %v607, %v604
  %v618 = vld [vmem:[%s5] sm:$0x1]
  %v620 = vlaneseq
  %v621 = vshrl.u32 %v620, 7
  %v622 = vsub.s32 0, %v621
  %v623 = vrot.slane %v618, %v622
  %625 = vmatprep.subr.bf16.mxu0 0
  %626 = vmatpush1.bf16.msra.mxu0 %v617
  %627 = vmatprep.subr.bf16.mxu0 0
  %628 = vmatpush1.bf16.msra.mxu0 %v616
  %629 = vmatprep.subr.bf16.mxu0 0
  %630 = vmatpush1.bf16.msra.mxu0 %v615
  %631 = vmatprep.subr.bf16.mxu0 0
  %632 = vmatpush1.bf16.msra.mxu0 %v614
  %633 = vmatprep.subr.bf16.mxu0 0
  %634 = vmatpush1.bf16.msra.mxu0 %v613
  %635 = vmatprep.subr.bf16.mxu0 0
  %636 = vmatpush1.bf16.msra.mxu0 %v612
  %637 = vmatprep.subr.bf16.mxu0 0
  %638 = vmatpush1.bf16.msra.mxu0 %v611
  %639 = vmatprep.subr.bf16.mxu0 0
  %640 = vmatpush1.bf16.msra.mxu0 %v610
  %641 = vmatprep.subr.bf16.mxu0 0
  %642 = vmatpush2.bf16.msra.mxu0 0
  %643 = vmatprep.subr.bf16.mxu0 0
  %644 = vmatpush2.bf16.msra.mxu0 0
  %645 = vmatprep.subr.bf16.mxu0 0
  %646 = vmatpush2.bf16.msra.mxu0 0
  %647 = vmatprep.subr.bf16.mxu0 0
  %648 = vmatpush2.bf16.msra.mxu0 0
  %649 = vmatprep.subr.bf16.mxu0 0
  %650 = vmatpush2.bf16.msra.mxu0 0
  %651 = vmatprep.subr.bf16.mxu0 0
  %652 = vmatpush2.bf16.msra.mxu0 0
  %653 = vmatprep.subr.bf16.mxu0 0
  %654 = vmatpush2.bf16.msra.mxu0 0
  %655 = vmatprep.subr.bf16.mxu0 0
  %656 = vmatpush2.bf16.msra.mxu0 0
  %657 = vmatprep.mubr.bf16.mxu0 0
  %658 = vmatmul.mubr.bf16.gmra.mxu0 %v312
  %v659 = vpop.f32.mrf.mxu0
  %v660 = vadd.f32 %v623, %v659
  %v661 = vpop.f32.mrf.mxu0
  %v662 = vpop.f32.mrf.mxu0
  %v663 = vadd.f32 %v623, %v662
  %v664 = vpop.f32.mrf.mxu0
  %665 = vmatprep.mubr.bf16.mxu0 0
  %666 = vmatmul.mubr.bf16.gmra.mxu0 %v313
  %v667 = vpop.f32.mrf.mxu0
  %v668 = vadd.f32 %v623, %v667
  %v669 = vpop.f32.mrf.mxu0
  %v670 = vpop.f32.mrf.mxu0
  %v671 = vadd.f32 %v623, %v670
  %v672 = vpop.f32.mrf.mxu0
  %673 = vmatprep.mubr.bf16.mxu0 0
  %674 = vmatmul.mubr.bf16.gmra.mxu0 %v314
  %v675 = vpop.f32.mrf.mxu0
  %v676 = vadd.f32 %v623, %v675
  %v677 = vpop.f32.mrf.mxu0
  %v678 = vpop.f32.mrf.mxu0
  %v679 = vadd.f32 %v623, %v678
  %v680 = vpop.f32.mrf.mxu0
  %681 = vmatprep.mubr.bf16.mxu0 0
  %682 = vmatmul.mubr.bf16.gmra.mxu0 %v315
  %v683 = vpop.f32.mrf.mxu0
  %v684 = vadd.f32 %v623, %v683
  %v685 = vpop.f32.mrf.mxu0
  %v686 = vpop.f32.mrf.mxu0
  %v687 = vadd.f32 %v623, %v686
  %v688 = vpop.f32.mrf.mxu0
  %689 = vmatprep.mubr.bf16.mxu0 0
  %690 = vmatmul.mubr.bf16.gmra.mxu0 %v316
  %v691 = vpop.f32.mrf.mxu0
  %v692 = vadd.f32 %v623, %v691
  %v693 = vpop.f32.mrf.mxu0
  %v694 = vpop.f32.mrf.mxu0
  %v695 = vadd.f32 %v623, %v694
  %v696 = vpop.f32.mrf.mxu0
  %697 = vmatprep.mubr.bf16.mxu0 0
  %698 = vmatmul.mubr.bf16.gmra.mxu0 %v317
  %v699 = vpop.f32.mrf.mxu0
  %v700 = vadd.f32 %v623, %v699
  %v701 = vpop.f32.mrf.mxu0
  %v702 = vpop.f32.mrf.mxu0
  %v703 = vadd.f32 %v623, %v702
  %v704 = vpop.f32.mrf.mxu0
  %705 = vmatprep.mubr.bf16.mxu0 0
  %706 = vmatmul.mubr.bf16.gmra.mxu0 %v318
  %v707 = vpop.f32.mrf.mxu0
  %v708 = vadd.f32 %v623, %v707
  %v709 = vpop.f32.mrf.mxu0
  %v710 = vpop.f32.mrf.mxu0
  %v711 = vadd.f32 %v623, %v710
  %v712 = vpop.f32.mrf.mxu0
  %713 = vmatprep.mubr.bf16.mxu0 0
  %714 = vmatmul.mubr.bf16.gmra.mxu0 %v319
  %v715 = vpop.f32.mrf.mxu0
  %v716 = vadd.f32 %v623, %v715
  %v717 = vpop.f32.mrf.mxu0
  %v718 = vpop.f32.mrf.mxu0
  %v719 = vadd.f32 %v623, %v718
  %v720 = vpop.f32.mrf.mxu0
  %721 = vdwg.mxu0
  %v722 = vmax.f32 %v660, 0.0
  %v723 = vmax.f32 %v663, 0.0
  %v724 = vmax.f32 %v668, 0.0
  %v725 = vmax.f32 %v671, 0.0
  %v726 = vmax.f32 %v676, 0.0
  %v727 = vmax.f32 %v679, 0.0
  %v728 = vmax.f32 %v684, 0.0
  %v729 = vmax.f32 %v687, 0.0
  %v730 = vmax.f32 %v692, 0.0
  %v731 = vmax.f32 %v695, 0.0
  %v732 = vmax.f32 %v700, 0.0
  %v733 = vmax.f32 %v703, 0.0
  %v734 = vmax.f32 %v708, 0.0
  %v735 = vmax.f32 %v711, 0.0
  %v736 = vmax.f32 %v716, 0.0
  %v737 = vmax.f32 %v719, 0.0
  %v738 = vpack.c.bf16 %v723, %v722
  %v739 = vpack.c.bf16 %v725, %v724
  %v740 = vpack.c.bf16 %v727, %v726
  %v741 = vpack.c.bf16 %v729, %v728
  %v742 = vpack.c.bf16 %v731, %v730
  %v743 = vpack.c.bf16 %v733, %v732
  %v744 = vpack.c.bf16 %v735, %v734
  %v745 = vpack.c.bf16 %v737, %v736
  %v754 = vunpack.c.l.b16 %v738
  %v755 = vunpack.c.h.b16 %v738
  %v756 = vunpack.c.l.b16 %v739
  %v757 = vunpack.c.h.b16 %v739
  %v758 = vunpack.c.l.b16 %v740
  %v759 = vunpack.c.h.b16 %v740
  %v760 = vunpack.c.l.b16 %v741
  %v761 = vunpack.c.h.b16 %v741
  %v762 = vunpack.c.l.b16 %v742
  %v763 = vunpack.c.h.b16 %v742
  %v764 = vunpack.c.l.b16 %v743
  %v765 = vunpack.c.h.b16 %v743
  %v766 = vunpack.c.l.b16 %v744
  %v767 = vunpack.c.h.b16 %v744
  %v768 = vunpack.c.l.b16 %v745
  %v769 = vunpack.c.h.b16 %v745
  %v770 = vpack.c.b16 %v754, %v754
  %v771 = vpack.c.b16 %v755, %v755
  %v772 = vpack.c.b16 %v756, %v756
  %v773 = vpack.c.b16 %v757, %v757
  %v774 = vpack.c.b16 %v758, %v758
  %v775 = vpack.c.b16 %v759, %v759
  %v776 = vpack.c.b16 %v760, %v760
  %v777 = vpack.c.b16 %v761, %v761
  %v778 = vpack.c.b16 %v762, %v762
  %v779 = vpack.c.b16 %v763, %v763
  %v780 = vpack.c.b16 %v764, %v764
  %v781 = vpack.c.b16 %v765, %v765
  %v782 = vpack.c.b16 %v766, %v766
  %v783 = vpack.c.b16 %v767, %v767
  %v784 = vpack.c.b16 %v768, %v768
  %v785 = vpack.c.b16 %v769, %v769
  %802 = vst [vmem:[%s6] sm:$0xf] %v770
  %803 = vst [vmem:[%s6 + $0x4] sm:$0xf] %v771
  %804 = vst [vmem:[%s6 + $0x8] sm:$0xf] %v772
  %805 = vst [vmem:[%s6 + $0xc] sm:$0xf] %v773
  %806 = vst [vmem:[%s6 + $0x10] sm:$0xf] %v774
  %807 = vst [vmem:[%s6 + $0x14] sm:$0xf] %v775
  %808 = vst [vmem:[%s6 + $0x18] sm:$0xf] %v776
  %809 = vst [vmem:[%s6 + $0x1c] sm:$0xf] %v777
  %810 = vst [vmem:[%s6 + $0x20] sm:$0xf] %v778
  %811 = vst [vmem:[%s6 + $0x24] sm:$0xf] %v779
  %812 = vst [vmem:[%s6 + $0x28] sm:$0xf] %v780
  %813 = vst [vmem:[%s6 + $0x2c] sm:$0xf] %v781
  %814 = vst [vmem:[%s6 + $0x30] sm:$0xf] %v782
  %815 = vst [vmem:[%s6 + $0x34] sm:$0xf] %v783
  %816 = vst [vmem:[%s6 + $0x38] sm:$0xf] %v784
  %817 = vst [vmem:[%s6 + $0x3c] sm:$0xf] %v785
  // Predicated region
  $region26: #{gcn_forward.2} parent=0 // pred_check
    _
  $region27: #{gcn_forward.2} parent=0 // pred_check_branch
    %819 = sbr.rel (0) target = $region29
  $region28: #{gcn_forward.2} parent=0 // pred_region
    _
  $region29: #{gcn_forward.2} parent=0 // pred_fallthru
    _
  // Predicated region
  $region30: #{gcn_forward.2} parent=0 // pred_check
    _
  $region31: #{gcn_forward.2} parent=0 // pred_check_branch
    %821 = sbr.rel (0) target = $region33
  $region32: #{gcn_forward.2} parent=0 // pred_region
    _
  $region33: #{gcn_forward.2} parent=0 // pred_fallthru
    _

// kernel: gcn_forward.3
$region0: #{gcn_forward.3}
  #allocation0 [shape = 'u32[]', space=smem, size = 0x4, offset = 0x4, fixed_abs, tag = 'smem constant byte address 0x4 - core index']
  #allocation1 [shape = 'u32[144,128]{1,0:T(1,128)}', space=vmem, size = 0x12000, scoped, tag = 'internal scratch']
  #allocation2 [shape = 'f32[8,128]{1,0:T(8,128)}', space=vmem, size = 0x1000, scoped, tag = 'scratch operand']
  #allocation3 [shape = 'f32[8,128]{1,0:T(8,128)}', space=vmem, size = 0x1000, scoped, tag = 'scratch operand']
  #allocation4 [shape = 'f32[8,128]{1,0:T(8,128)}', space=vmem, size = 0x1000, scoped, tag = 'scratch operand']
  %s0 = inlined_call_operand.vmem [shape: bf16[128,128], index: 0, kind: input, shape index: {}]
  %s1 = inlined_call_operand.vmem [shape: f32[8,128], index: 1, kind: input, shape index: {}]
  %s2 = inlined_call_operand.vmem [shape: f32[128,8], index: 2, kind: input, shape index: {}]
  %s3 = inlined_call_operand.vmem [shape: f32[128,128], index: 3, kind: input, shape index: {}]
  %s4 = inlined_call_operand.vmem [shape: f32[128,128], index: 4, kind: input, shape index: {}]
  %s5 = inlined_call_operand.vmem [shape: f32[1,128], index: 5, kind: input, shape index: {}]
  %s6 = inlined_call_operand.vmem [shape: f32[8,128], index: 6, kind: output, shape index: {}]
  %s7 = sld [smem:[#allocation0]]
  $region42: #{gcn_forward.3} parent=0
    _
  %s9 = ssub.s32 1, %s7
  %s10 = scalar_select 0, %s9, %s7
  // Predicated region
  $region2: #{gcn_forward.3} parent=0 // pred_check
    _
  $region3: #{gcn_forward.3} parent=0 // pred_check_branch
    %12 = sbr.rel (0) target = $region5
  $region4: #{gcn_forward.3} parent=0 // pred_region
    _
  $region5: #{gcn_forward.3} parent=0 // pred_fallthru
    _
  // Predicated region
  $region6: #{gcn_forward.3} parent=0 // pred_check
    _
  $region7: #{gcn_forward.3} parent=0 // pred_check_branch
    %14 = sbr.rel (0) target = $region9
  $region8: #{gcn_forward.3} parent=0 // pred_region
    _
  $region9: #{gcn_forward.3} parent=0 // pred_fallthru
    _
  // Predicated region
  $region10: #{gcn_forward.3} parent=0 // pred_check
    _
  $region11: #{gcn_forward.3} parent=0 // pred_check_branch
    %16 = sbr.rel (0) target = $region13
  $region12: #{gcn_forward.3} parent=0 // pred_region
    _
  $region13: #{gcn_forward.3} parent=0 // pred_fallthru
    _
  // Predicated region
  $region14: #{gcn_forward.3} parent=0 // pred_check
    _
  $region15: #{gcn_forward.3} parent=0 // pred_check_branch
    %18 = sbr.rel (0) target = $region17
  $region16: #{gcn_forward.3} parent=0 // pred_region
    _
  $region17: #{gcn_forward.3} parent=0 // pred_fallthru
    _
  // Predicated region
  $region18: #{gcn_forward.3} parent=0 // pred_check
    _
  $region19: #{gcn_forward.3} parent=0 // pred_check_branch
    %20 = sbr.rel (0) target = $region21
  $region20: #{gcn_forward.3} parent=0 // pred_region
    _
  $region21: #{gcn_forward.3} parent=0 // pred_fallthru
    _
  // Predicated region
  $region22: #{gcn_forward.3} parent=0 // pred_check
    _
  $region23: #{gcn_forward.3} parent=0 // pred_check_branch
    %22 = sbr.rel (0) target = $region25
  $region24: #{gcn_forward.3} parent=0 // pred_region
    _
  $region25: #{gcn_forward.3} parent=0 // pred_fallthru
    _
  %p23 = scmp.eq.s32.totalorder 0, 0
  // Predicated region
  $region26: #{gcn_forward.3} parent=0 // pred_check
    %p24 = pneg %p23
  $region27: #{gcn_forward.3} parent=0 // pred_check_branch
    %26 = sbr.rel (%p24) target = $region29
  $region28: #{gcn_forward.3} parent=0 // pred_region
    %27 = vst [vmem:[#allocation2] sm:$0xff] -3e+38
    %28 = vst [vmem:[#allocation3] sm:$0xff] 0.0
    %29 = vst [vmem:[#allocation4] sm:$0xff] 0.0
  $region29: #{gcn_forward.3} parent=0 // pred_fallthru
    _
  %v30 = vld [vmem:[%s0] sm:$0xf]
  %v31 = vld [vmem:[%s0 + $0x4] sm:$0xf]
  %v32 = vld [vmem:[%s0 + $0x8] sm:$0xf]
  %v33 = vld [vmem:[%s0 + $0xc] sm:$0xf]
  %v34 = vld [vmem:[%s0 + $0x10] sm:$0xf]
  %v35 = vld [vmem:[%s0 + $0x14] sm:$0xf]
  %v36 = vld [vmem:[%s0 + $0x18] sm:$0xf]
  %v37 = vld [vmem:[%s0 + $0x1c] sm:$0xf]
  %v38 = vld [vmem:[%s0 + $0x20] sm:$0xf]
  %v39 = vld [vmem:[%s0 + $0x24] sm:$0xf]
  %v40 = vld [vmem:[%s0 + $0x28] sm:$0xf]
  %v41 = vld [vmem:[%s0 + $0x2c] sm:$0xf]
  %v42 = vld [vmem:[%s0 + $0x30] sm:$0xf]
  %v43 = vld [vmem:[%s0 + $0x34] sm:$0xf]
  %v44 = vld [vmem:[%s0 + $0x38] sm:$0xf]
  %v45 = vld [vmem:[%s0 + $0x3c] sm:$0xf]
  %v46 = vunpack.c.l.bf16 %v30
  %v47 = vunpack.c.l.bf16 %v31
  %v48 = vunpack.c.l.bf16 %v32
  %v49 = vunpack.c.l.bf16 %v33
  %v50 = vunpack.c.l.bf16 %v34
  %v51 = vunpack.c.l.bf16 %v35
  %v52 = vunpack.c.l.bf16 %v36
  %v53 = vunpack.c.l.bf16 %v37
  %v54 = vunpack.c.l.bf16 %v38
  %v55 = vunpack.c.l.bf16 %v39
  %v56 = vunpack.c.l.bf16 %v40
  %v57 = vunpack.c.l.bf16 %v41
  %v58 = vunpack.c.l.bf16 %v42
  %v59 = vunpack.c.l.bf16 %v43
  %v60 = vunpack.c.l.bf16 %v44
  %v61 = vunpack.c.l.bf16 %v45
  %v62 = vld [vmem:[%s1] sm:$0xff]
  %v63 = vld [vmem:[%s2] sm:$0xff]
  %v64 = vld [vmem:[%s2 + $0x8] sm:$0xff]
  %v65 = vld [vmem:[%s2 + $0x10] sm:$0xff]
  %v66 = vld [vmem:[%s2 + $0x18] sm:$0xff]
  %v67 = vld [vmem:[%s2 + $0x20] sm:$0xff]
  %v68 = vld [vmem:[%s2 + $0x28] sm:$0xff]
  %v69 = vld [vmem:[%s2 + $0x30] sm:$0xff]
  %v70 = vld [vmem:[%s2 + $0x38] sm:$0xff]
  %v71 = vld [vmem:[%s2 + $0x40] sm:$0xff]
  %v72 = vld [vmem:[%s2 + $0x48] sm:$0xff]
  %v73 = vld [vmem:[%s2 + $0x50] sm:$0xff]
  %v74 = vld [vmem:[%s2 + $0x58] sm:$0xff]
  %v75 = vld [vmem:[%s2 + $0x60] sm:$0xff]
  %v76 = vld [vmem:[%s2 + $0x68] sm:$0xff]
  %v77 = vld [vmem:[%s2 + $0x70] sm:$0xff]
  %v78 = vld [vmem:[%s2 + $0x78] sm:$0xff]
  %v79 = vld [vmem:[#allocation3] sm:$0xff]
  %80 = vmatprep.subr.mxu0 0.0
  %81 = vmatpush1.msra.mxu0 %v61
  %82 = vmatprep.subr.mxu0 0.0
  %83 = vmatpush1.msra.mxu0 %v60
  %84 = vmatprep.subr.mxu0 0.0
  %85 = vmatpush1.msra.mxu0 %v59
  %86 = vmatprep.subr.mxu0 0.0
  %87 = vmatpush1.msra.mxu0 %v58
  %88 = vmatprep.subr.mxu0 0.0
  %89 = vmatpush1.msra.mxu0 %v57
  %90 = vmatprep.subr.mxu0 0.0
  %91 = vmatpush1.msra.mxu0 %v56
  %92 = vmatprep.subr.mxu0 0.0
  %93 = vmatpush1.msra.mxu0 %v55
  %94 = vmatprep.subr.mxu0 0.0
  %95 = vmatpush1.msra.mxu0 %v54
  %96 = vmatprep.subr.mxu0 0.0
  %97 = vmatpush1.msra.mxu0 %v53
  %98 = vmatprep.subr.mxu0 0.0
  %99 = vmatpush1.msra.mxu0 %v52
  %100 = vmatprep.subr.mxu0 0.0
  %101 = vmatpush1.msra.mxu0 %v51
  %102 = vmatprep.subr.mxu0 0.0
  %103 = vmatpush1.msra.mxu0 %v50
  %104 = vmatprep.subr.mxu0 0.0
  %105 = vmatpush1.msra.mxu0 %v49
  %106 = vmatprep.subr.mxu0 0.0
  %107 = vmatpush1.msra.mxu0 %v48
  %108 = vmatprep.subr.mxu0 0.0
  %109 = vmatpush1.msra.mxu0 %v47
  %110 = vmatprep.subr.mxu0 0.0
  %111 = vmatpush1.msra.mxu0 %v46
  %112 = vmatprep.subr.mxu0 0.0
  %113 = vmatpush2.msra.mxu0 0.0
  %114 = vmatprep.subr.mxu0 0.0
  %115 = vmatpush2.msra.mxu0 0.0
  %116 = vmatprep.subr.mxu0 0.0
  %117 = vmatpush2.msra.mxu0 0.0
  %118 = vmatprep.subr.mxu0 0.0
  %119 = vmatpush2.msra.mxu0 0.0
  %120 = vmatprep.subr.mxu0 0.0
  %121 = vmatpush2.msra.mxu0 0.0
  %122 = vmatprep.subr.mxu0 0.0
  %123 = vmatpush2.msra.mxu0 0.0
  %124 = vmatprep.subr.mxu0 0.0
  %125 = vmatpush2.msra.mxu0 0.0
  %126 = vmatprep.subr.mxu0 0.0
  %127 = vmatpush2.msra.mxu0 0.0
  %128 = vmatprep.subr.mxu0 0.0
  %129 = vmatpush2.msra.mxu0 0.0
  %130 = vmatprep.subr.mxu0 0.0
  %131 = vmatpush2.msra.mxu0 0.0
  %132 = vmatprep.subr.mxu0 0.0
  %133 = vmatpush2.msra.mxu0 0.0
  %134 = vmatprep.subr.mxu0 0.0
  %135 = vmatpush2.msra.mxu0 0.0
  %136 = vmatprep.subr.mxu0 0.0
  %137 = vmatpush2.msra.mxu0 0.0
  %138 = vmatprep.subr.mxu0 0.0
  %139 = vmatpush2.msra.mxu0 0.0
  %140 = vmatprep.subr.mxu0 0.0
  %141 = vmatpush2.msra.mxu0 0.0
  %142 = vmatprep.subr.mxu0 0.0
  %143 = vmatpush2.msra.mxu0 0.0
  %144 = vmatprep.mubr.f32.mxu0 0.0
  %145 = vmatmul.mubr.f32.gmra.mxu0 %v62
  %v146 = vpop.f32.mrf.mxu0
  %v147 = vadd.f32 0.0, %v146
  %v148 = vpop.f32.mrf.mxu0
  %149 = vdwg.mxu0
  %v150 = vadd.f32 %v79, %v147
  %151 = vst [vmem:[#allocation3] sm:$0xff] %v150
  %v152 = vld [vmem:[#allocation4] sm:$0xff]
  %153 = vadd.xlane.f32.xlu0 %v62
  %v154 = vpop.xlane.xlu0 %153
  %v155 = vadd.f32 %v152, %v154
  %156 = vst [vmem:[#allocation4] sm:$0xff] %v155
  %vm157 = vcmp.gt.f32.partialorder %v63, 0.0
  %vm158 = vcmp.gt.f32.partialorder %v64, 0.0
  %vm159 = vcmp.gt.f32.partialorder %v65, 0.0
  %vm160 = vcmp.gt.f32.partialorder %v66, 0.0
  %vm161 = vcmp.gt.f32.partialorder %v67, 0.0
  %vm162 = vcmp.gt.f32.partialorder %v68, 0.0
  %vm163 = vcmp.gt.f32.partialorder %v69, 0.0
  %vm164 = vcmp.gt.f32.partialorder %v70, 0.0
  %vm165 = vcmp.gt.f32.partialorder %v71, 0.0
  %vm166 = vcmp.gt.f32.partialorder %v72, 0.0
  %vm167 = vcmp.gt.f32.partialorder %v73, 0.0
  %vm168 = vcmp.gt.f32.partialorder %v74, 0.0
  %vm169 = vcmp.gt.f32.partialorder %v75, 0.0
  %vm170 = vcmp.gt.f32.partialorder %v76, 0.0
  %vm171 = vcmp.gt.f32.partialorder %v77, 0.0
  %vm172 = vcmp.gt.f32.partialorder %v78, 0.0
  %v173 = vsel %vm157, 1, 0
  %v174 = vsel %vm158, 1, 0
  %v175 = vsel %vm159, 1, 0
  %v176 = vsel %vm160, 1, 0
  %v177 = vsel %vm161, 1, 0
  %v178 = vsel %vm162, 1, 0
  %v179 = vsel %vm163, 1, 0
  %v180 = vsel %vm164, 1, 0
  %v181 = vsel %vm165, 1, 0
  %v182 = vsel %vm166, 1, 0
  %v183 = vsel %vm167, 1, 0
  %v184 = vsel %vm168, 1, 0
  %v185 = vsel %vm169, 1, 0
  %v186 = vsel %vm170, 1, 0
  %v187 = vsel %vm171, 1, 0
  %v188 = vsel %vm172, 1, 0
  %189 = vset.pattern.permute.xlu0 0
  %190 = vperm.xlu0 %189, %v173
  %v191 = vpop.permute.xlu0 %190
  %192 = vset.pattern.permute.xlu0 0
  %193 = vperm.xlu0 %192, %v174
  %v194 = vpop.permute.xlu0 %193
  %195 = vset.pattern.permute.xlu0 0
  %196 = vperm.xlu0 %195, %v175
  %v197 = vpop.permute.xlu0 %196
  %198 = vset.pattern.permute.xlu0 0
  %199 = vperm.xlu0 %198, %v176
  %v200 = vpop.permute.xlu0 %199
  %201 = vset.pattern.permute.xlu0 0
  %202 = vperm.xlu0 %201, %v177
  %v203 = vpop.permute.xlu0 %202
  %204 = vset.pattern.permute.xlu0 0
  %205 = vperm.xlu0 %204, %v178
  %v206 = vpop.permute.xlu0 %205
  %207 = vset.pattern.permute.xlu0 0
  %208 = vperm.xlu0 %207, %v179
  %v209 = vpop.permute.xlu0 %208
  %210 = vset.pattern.permute.xlu0 0
  %211 = vperm.xlu0 %210, %v180
  %v212 = vpop.permute.xlu0 %211
  %213 = vset.pattern.permute.xlu0 0
  %214 = vperm.xlu0 %213, %v181
  %v215 = vpop.permute.xlu0 %214
  %216 = vset.pattern.permute.xlu0 0
  %217 = vperm.xlu0 %216, %v182
  %v218 = vpop.permute.xlu0 %217
  %219 = vset.pattern.permute.xlu0 0
  %220 = vperm.xlu0 %219, %v183
  %v221 = vpop.permute.xlu0 %220
  %222 = vset.pattern.permute.xlu0 0
  %223 = vperm.xlu0 %222, %v184
  %v224 = vpop.permute.xlu0 %223
  %225 = vset.pattern.permute.xlu0 0
  %226 = vperm.xlu0 %225, %v185
  %v227 = vpop.permute.xlu0 %226
  %228 = vset.pattern.permute.xlu0 0
  %229 = vperm.xlu0 %228, %v186
  %v230 = vpop.permute.xlu0 %229
  %231 = vset.pattern.permute.xlu0 0
  %232 = vperm.xlu0 %231, %v187
  %v233 = vpop.permute.xlu0 %232
  %234 = vset.pattern.permute.xlu0 0
  %235 = vperm.xlu0 %234, %v188
  %v236 = vpop.permute.xlu0 %235
  %vm237 = vcmp.eq.s32.totalorder %v191, 1
  %vm238 = vcmp.eq.s32.totalorder %v194, 1
  %vm239 = vcmp.eq.s32.totalorder %v197, 1
  %vm240 = vcmp.eq.s32.totalorder %v200, 1
  %vm241 = vcmp.eq.s32.totalorder %v203, 1
  %vm242 = vcmp.eq.s32.totalorder %v206, 1
  %vm243 = vcmp.eq.s32.totalorder %v209, 1
  %vm244 = vcmp.eq.s32.totalorder %v212, 1
  %vm245 = vcmp.eq.s32.totalorder %v215, 1
  %vm246 = vcmp.eq.s32.totalorder %v218, 1
  %vm247 = vcmp.eq.s32.totalorder %v221, 1
  %vm248 = vcmp.eq.s32.totalorder %v224, 1
  %vm249 = vcmp.eq.s32.totalorder %v227, 1
  %vm250 = vcmp.eq.s32.totalorder %v230, 1
  %vm251 = vcmp.eq.s32.totalorder %v233, 1
  %vm252 = vcmp.eq.s32.totalorder %v236, 1
  %v253 = vsel %vm237, %v46, -3e+38
  %v254 = vsel %vm238, %v47, -3e+38
  %v255 = vsel %vm239, %v48, -3e+38
  %v256 = vsel %vm240, %v49, -3e+38
  %v257 = vsel %vm241, %v50, -3e+38
  %v258 = vsel %vm242, %v51, -3e+38
  %v259 = vsel %vm243, %v52, -3e+38
  %v260 = vsel %vm244, %v53, -3e+38
  %v261 = vsel %vm245, %v54, -3e+38
  %v262 = vsel %vm246, %v55, -3e+38
  %v263 = vsel %vm247, %v56, -3e+38
  %v264 = vsel %vm248, %v57, -3e+38
  %v265 = vsel %vm249, %v58, -3e+38
  %v266 = vsel %vm250, %v59, -3e+38
  %v267 = vsel %vm251, %v60, -3e+38
  %v268 = vsel %vm252, %v61, -3e+38
  %v269 = vmax.f32 %v253, %v257
  %v270 = vmax.f32 %v254, %v258
  %v271 = vmax.f32 %v255, %v259
  %v272 = vmax.f32 %v256, %v260
  %v273 = vmax.f32 %v269, %v261
  %v274 = vmax.f32 %v270, %v262
  %v275 = vmax.f32 %v271, %v263
  %v276 = vmax.f32 %v272, %v264
  %v277 = vmax.f32 %v273, %v265
  %v278 = vmax.f32 %v274, %v266
  %v279 = vmax.f32 %v275, %v267
  %v280 = vmax.f32 %v276, %v268
  %v281 = vmax.f32 %v277, %v278
  %v282 = vmax.f32 %v279, %v280
  %v283 = vmax.f32 %v281, %v282
  %v284 = vrot.slane %v283, 4
  %v285 = vmax.f32 %v283, %v284
  %v286 = vrot.slane %v285, 2
  %v287 = vmax.f32 %v285, %v286
  %v288 = vrot.slane %v287, 1
  %v289 = vmax.f32 %v287, %v288
  %290 = vset.pattern.permute.xlu0 1
  %291 = vperm.xlu0 %290, %v173
  %v292 = vpop.permute.xlu0 %291
  %293 = vset.pattern.permute.xlu0 1
  %294 = vperm.xlu0 %293, %v174
  %v295 = vpop.permute.xlu0 %294
  %296 = vset.pattern.permute.xlu0 1
  %297 = vperm.xlu0 %296, %v175
  %v298 = vpop.permute.xlu0 %297
  %299 = vset.pattern.permute.xlu0 1
  %300 = vperm.xlu0 %299, %v176
  %v301 = vpop.permute.xlu0 %300
  %302 = vset.pattern.permute.xlu0 1
  %303 = vperm.xlu0 %302, %v177
  %v304 = vpop.permute.xlu0 %303
  %305 = vset.pattern.permute.xlu0 1
  %306 = vperm.xlu0 %305, %v178
  %v307 = vpop.permute.xlu0 %306
  %308 = vset.pattern.permute.xlu0 1
  %309 = vperm.xlu0 %308, %v179
  %v310 = vpop.permute.xlu0 %309
  %311 = vset.pattern.permute.xlu0 1
  %312 = vperm.xlu0 %311, %v180
  %v313 = vpop.permute.xlu0 %312
  %314 = vset.pattern.permute.xlu0 1
  %315 = vperm.xlu0 %314, %v181
  %v316 = vpop.permute.xlu0 %315
  %317 = vset.pattern.permute.xlu0 1
  %318 = vperm.xlu0 %317, %v182
  %v319 = vpop.permute.xlu0 %318
  %320 = vset.pattern.permute.xlu0 1
  %321 = vperm.xlu0 %320, %v183
  %v322 = vpop.permute.xlu0 %321
  %323 = vset.pattern.permute.xlu0 1
  %324 = vperm.xlu0 %323, %v184
  %v325 = vpop.permute.xlu0 %324
  %326 = vset.pattern.permute.xlu0 1
  %327 = vperm.xlu0 %326, %v185
  %v328 = vpop.permute.xlu0 %327
  %329 = vset.pattern.permute.xlu0 1
  %330 = vperm.xlu0 %329, %v186
  %v331 = vpop.permute.xlu0 %330
  %332 = vset.pattern.permute.xlu0 1
  %333 = vperm.xlu0 %332, %v187
  %v334 = vpop.permute.xlu0 %333
  %335 = vset.pattern.permute.xlu0 1
  %336 = vperm.xlu0 %335, %v188
  %v337 = vpop.permute.xlu0 %336
  %vm338 = vcmp.eq.s32.totalorder %v292, 1
  %vm339 = vcmp.eq.s32.totalorder %v295, 1
  %vm340 = vcmp.eq.s32.totalorder %v298, 1
  %vm341 = vcmp.eq.s32.totalorder %v301, 1
  %vm342 = vcmp.eq.s32.totalorder %v304, 1
  %vm343 = vcmp.eq.s32.totalorder %v307, 1
  %vm344 = vcmp.eq.s32.totalorder %v310, 1
  %vm345 = vcmp.eq.s32.totalorder %v313, 1
  %vm346 = vcmp.eq.s32.totalorder %v316, 1
  %vm347 = vcmp.eq.s32.totalorder %v319, 1
  %vm348 = vcmp.eq.s32.totalorder %v322, 1
  %vm349 = vcmp.eq.s32.totalorder %v325, 1
  %vm350 = vcmp.eq.s32.totalorder %v328, 1
  %vm351 = vcmp.eq.s32.totalorder %v331, 1
  %vm352 = vcmp.eq.s32.totalorder %v334, 1
  %vm353 = vcmp.eq.s32.totalorder %v337, 1
  %v354 = vsel %vm338, %v46, -3e+38
  %v355 = vsel %vm339, %v47, -3e+38
  %v356 = vsel %vm340, %v48, -3e+38
  %v357 = vsel %vm341, %v49, -3e+38
  %v358 = vsel %vm342, %v50, -3e+38
  %v359 = vsel %vm343, %v51, -3e+38
  %v360 = vsel %vm344, %v52, -3e+38
  %v361 = vsel %vm345, %v53, -3e+38
  %v362 = vsel %vm346, %v54, -3e+38
  %v363 = vsel %vm347, %v55, -3e+38
  %v364 = vsel %vm348, %v56, -3e+38
  %v365 = vsel %vm349, %v57, -3e+38
  %v366 = vsel %vm350, %v58, -3e+38
  %v367 = vsel %vm351, %v59, -3e+38
  %v368 = vsel %vm352, %v60, -3e+38
  %v369 = vsel %vm353, %v61, -3e+38
  %v370 = vmax.f32 %v354, %v358
  %v371 = vmax.f32 %v355, %v359
  %v372 = vmax.f32 %v356, %v360
  %v373 = vmax.f32 %v357, %v361
  %v374 = vmax.f32 %v370, %v362
  %v375 = vmax.f32 %v371, %v363
  %v376 = vmax.f32 %v372, %v364
  %v377 = vmax.f32 %v373, %v365
  %v378 = vmax.f32 %v374, %v366
  %v379 = vmax.f32 %v375, %v367
  %v380 = vmax.f32 %v376, %v368
  %v381 = vmax.f32 %v377, %v369
  %v382 = vmax.f32 %v378, %v379
  %v383 = vmax.f32 %v380, %v381
  %v384 = vmax.f32 %v382, %v383
  %v385 = vrot.slane %v384, 4
  %v386 = vmax.f32 %v384, %v385
  %v387 = vrot.slane %v386, 2
  %v388 = vmax.f32 %v386, %v387
  %v389 = vrot.slane %v388, 1
  %v390 = vmax.f32 %v388, %v389
  %vm391 = vcmask 1040384
  %v392 = vsel %vm391, %v289, %v390
  %vm393 = vcmask 1041408
  %v394 = vsel %vm393, %v392, -3e+38
  %vm395 = vcmask 1042432
  %v396 = vsel %vm395, %v394, -3e+38
  %vm397 = vcmask 1043456
  %v398 = vsel %vm397, %v396, -3e+38
  %vm399 = vcmask 1044480
  %v400 = vsel %vm399, %v398, -3e+38
  %vm401 = vcmask 1045504
  %v402 = vsel %vm401, %v400, -3e+38
  %vm403 = vcmask 1046528
  %v404 = vsel %vm403, %v402, -3e+38
  %v405 = vld [vmem:[#allocation2] sm:$0xff]
  %v406 = vmax.f32 %v405, %v404
  %407 = vst [vmem:[#allocation2] sm:$0xff] %v406
  // Predicated region
  $region30: #{gcn_forward.3} parent=0 // pred_check
    %p408 = pneg %p23
  $region31: #{gcn_forward.3} parent=0 // pred_check_branch
    %410 = sbr.rel (%p408) target = $region33
  $region32: #{gcn_forward.3} parent=0 // pred_region
    %v411 = vld [vmem:[#allocation4] sm:$0xff]
    %v412 = vmax.f32 %v411, 1.0
    %v413 = vrcp.pop %v412
    %v414 = vld [vmem:[#allocation3] sm:$0xff]
    %v415 = vmul.f32 %v414, %v413
    %vm416 = vcmp.gt.f32.partialorder %v411, 0.0
    %v417 = vld [vmem:[#allocation2] sm:$0xff]
    %v418 = vsel %vm416, %v417, 0.0
    %v419 = vld [vmem:[%s3] sm:$0xff]
    %v420 = vld [vmem:[%s3 + $0x8] sm:$0xff]
    %v421 = vld [vmem:[%s3 + $0x10] sm:$0xff]
    %v422 = vld [vmem:[%s3 + $0x18] sm:$0xff]
    %v423 = vld [vmem:[%s3 + $0x20] sm:$0xff]
    %v424 = vld [vmem:[%s3 + $0x28] sm:$0xff]
    %v425 = vld [vmem:[%s3 + $0x30] sm:$0xff]
    %v426 = vld [vmem:[%s3 + $0x38] sm:$0xff]
    %v427 = vld [vmem:[%s3 + $0x40] sm:$0xff]
    %v428 = vld [vmem:[%s3 + $0x48] sm:$0xff]
    %v429 = vld [vmem:[%s3 + $0x50] sm:$0xff]
    %v430 = vld [vmem:[%s3 + $0x58] sm:$0xff]
    %v431 = vld [vmem:[%s3 + $0x60] sm:$0xff]
    %v432 = vld [vmem:[%s3 + $0x68] sm:$0xff]
    %v433 = vld [vmem:[%s3 + $0x70] sm:$0xff]
    %v434 = vld [vmem:[%s3 + $0x78] sm:$0xff]
    %v435 = vld [vmem:[%s4] sm:$0xff]
    %v436 = vld [vmem:[%s4 + $0x8] sm:$0xff]
    %v437 = vld [vmem:[%s4 + $0x10] sm:$0xff]
    %v438 = vld [vmem:[%s4 + $0x18] sm:$0xff]
    %v439 = vld [vmem:[%s4 + $0x20] sm:$0xff]
    %v440 = vld [vmem:[%s4 + $0x28] sm:$0xff]
    %v441 = vld [vmem:[%s4 + $0x30] sm:$0xff]
    %v442 = vld [vmem:[%s4 + $0x38] sm:$0xff]
    %v443 = vld [vmem:[%s4 + $0x40] sm:$0xff]
    %v444 = vld [vmem:[%s4 + $0x48] sm:$0xff]
    %v445 = vld [vmem:[%s4 + $0x50] sm:$0xff]
    %v446 = vld [vmem:[%s4 + $0x58] sm:$0xff]
    %v447 = vld [vmem:[%s4 + $0x60] sm:$0xff]
    %v448 = vld [vmem:[%s4 + $0x68] sm:$0xff]
    %v449 = vld [vmem:[%s4 + $0x70] sm:$0xff]
    %v450 = vld [vmem:[%s4 + $0x78] sm:$0xff]
    %451 = vmatprep.subr.mxu0 0.0
    %452 = vmatpush1.msra.mxu0 %v450
    %453 = vmatprep.subr.mxu0 0.0
    %454 = vmatpush1.msra.mxu0 %v449
    %455 = vmatprep.subr.mxu0 0.0
    %456 = vmatpush1.msra.mxu0 %v448
    %457 = vmatprep.subr.mxu0 0.0
    %458 = vmatpush1.msra.mxu0 %v447
    %459 = vmatprep.subr.mxu0 0.0
    %460 = vmatpush1.msra.mxu0 %v446
    %461 = vmatprep.subr.mxu0 0.0
    %462 = vmatpush1.msra.mxu0 %v445
    %463 = vmatprep.subr.mxu0 0.0
    %464 = vmatpush1.msra.mxu0 %v444
    %465 = vmatprep.subr.mxu0 0.0
    %466 = vmatpush1.msra.mxu0 %v443
    %467 = vmatprep.subr.mxu0 0.0
    %468 = vmatpush1.msra.mxu0 %v442
    %469 = vmatprep.subr.mxu0 0.0
    %470 = vmatpush1.msra.mxu0 %v441
    %471 = vmatprep.subr.mxu0 0.0
    %472 = vmatpush1.msra.mxu0 %v440
    %473 = vmatprep.subr.mxu0 0.0
    %474 = vmatpush1.msra.mxu0 %v439
    %475 = vmatprep.subr.mxu0 0.0
    %476 = vmatpush1.msra.mxu0 %v438
    %477 = vmatprep.subr.mxu0 0.0
    %478 = vmatpush1.msra.mxu0 %v437
    %479 = vmatprep.subr.mxu0 0.0
    %480 = vmatpush1.msra.mxu0 %v436
    %481 = vmatprep.subr.mxu0 0.0
    %482 = vmatpush1.msra.mxu0 %v435
    %483 = vmatprep.subr.mxu0 0.0
    %484 = vmatpush2.msra.mxu0 0.0
    %485 = vmatprep.subr.mxu0 0.0
    %486 = vmatpush2.msra.mxu0 0.0
    %487 = vmatprep.subr.mxu0 0.0
    %488 = vmatpush2.msra.mxu0 0.0
    %489 = vmatprep.subr.mxu0 0.0
    %490 = vmatpush2.msra.mxu0 0.0
    %491 = vmatprep.subr.mxu0 0.0
    %492 = vmatpush2.msra.mxu0 0.0
    %493 = vmatprep.subr.mxu0 0.0
    %494 = vmatpush2.msra.mxu0 0.0
    %495 = vmatprep.subr.mxu0 0.0
    %496 = vmatpush2.msra.mxu0 0.0
    %497 = vmatprep.subr.mxu0 0.0
    %498 = vmatpush2.msra.mxu0 0.0
    %499 = vmatprep.subr.mxu0 0.0
    %500 = vmatpush2.msra.mxu0 0.0
    %501 = vmatprep.subr.mxu0 0.0
    %502 = vmatpush2.msra.mxu0 0.0
    %503 = vmatprep.subr.mxu0 0.0
    %504 = vmatpush2.msra.mxu0 0.0
    %505 = vmatprep.subr.mxu0 0.0
    %506 = vmatpush2.msra.mxu0 0.0
    %507 = vmatprep.subr.mxu0 0.0
    %508 = vmatpush2.msra.mxu0 0.0
    %509 = vmatprep.subr.mxu0 0.0
    %510 = vmatpush2.msra.mxu0 0.0
    %511 = vmatprep.subr.mxu0 0.0
    %512 = vmatpush2.msra.mxu0 0.0
    %513 = vmatprep.subr.mxu0 0.0
    %514 = vmatpush2.msra.mxu0 0.0
    %515 = vmatprep.mubr.f32.mxu0 0.0
    %516 = vmatmul.mubr.f32.gmra.mxu0 %v415
    %v517 = vpop.f32.mrf.mxu0
    %v518 = vadd.f32 0.0, %v517
    %v519 = vpop.f32.mrf.mxu0
    %520 = vdwg.mxu0
    %521 = vmatprep.subr.mxu0 0.0
    %522 = vmatpush1.msra.mxu0 %v434
    %523 = vmatprep.subr.mxu0 0.0
    %524 = vmatpush1.msra.mxu0 %v433
    %525 = vmatprep.subr.mxu0 0.0
    %526 = vmatpush1.msra.mxu0 %v432
    %527 = vmatprep.subr.mxu0 0.0
    %528 = vmatpush1.msra.mxu0 %v431
    %529 = vmatprep.subr.mxu0 0.0
    %530 = vmatpush1.msra.mxu0 %v430
    %531 = vmatprep.subr.mxu0 0.0
    %532 = vmatpush1.msra.mxu0 %v429
    %533 = vmatprep.subr.mxu0 0.0
    %534 = vmatpush1.msra.mxu0 %v428
    %535 = vmatprep.subr.mxu0 0.0
    %536 = vmatpush1.msra.mxu0 %v427
    %537 = vmatprep.subr.mxu0 0.0
    %538 = vmatpush1.msra.mxu0 %v426
    %539 = vmatprep.subr.mxu0 0.0
    %540 = vmatpush1.msra.mxu0 %v425
    %541 = vmatprep.subr.mxu0 0.0
    %542 = vmatpush1.msra.mxu0 %v424
    %543 = vmatprep.subr.mxu0 0.0
    %544 = vmatpush1.msra.mxu0 %v423
    %545 = vmatprep.subr.mxu0 0.0
    %546 = vmatpush1.msra.mxu0 %v422
    %547 = vmatprep.subr.mxu0 0.0
    %548 = vmatpush1.msra.mxu0 %v421
    %549 = vmatprep.subr.mxu0 0.0
    %550 = vmatpush1.msra.mxu0 %v420
    %551 = vmatprep.subr.mxu0 0.0
    %552 = vmatpush1.msra.mxu0 %v419
    %553 = vmatprep.subr.mxu0 0.0
    %554 = vmatpush2.msra.mxu0 0.0
    %555 = vmatprep.subr.mxu0 0.0
    %556 = vmatpush2.msra.mxu0 0.0
    %557 = vmatprep.subr.mxu0 0.0
    %558 = vmatpush2.msra.mxu0 0.0
    %559 = vmatprep.subr.mxu0 0.0
    %560 = vmatpush2.msra.mxu0 0.0
    %561 = vmatprep.subr.mxu0 0.0
    %562 = vmatpush2.msra.mxu0 0.0
    %563 = vmatprep.subr.mxu0 0.0
    %564 = vmatpush2.msra.mxu0 0.0
    %565 = vmatprep.subr.mxu0 0.0
    %566 = vmatpush2.msra.mxu0 0.0
    %567 = vmatprep.subr.mxu0 0.0
    %568 = vmatpush2.msra.mxu0 0.0
    %569 = vmatprep.subr.mxu0 0.0
    %570 = vmatpush2.msra.mxu0 0.0
    %571 = vmatprep.subr.mxu0 0.0
    %572 = vmatpush2.msra.mxu0 0.0
    %573 = vmatprep.subr.mxu0 0.0
    %574 = vmatpush2.msra.mxu0 0.0
    %575 = vmatprep.subr.mxu0 0.0
    %576 = vmatpush2.msra.mxu0 0.0
    %577 = vmatprep.subr.mxu0 0.0
    %578 = vmatpush2.msra.mxu0 0.0
    %579 = vmatprep.subr.mxu0 0.0
    %580 = vmatpush2.msra.mxu0 0.0
    %581 = vmatprep.subr.mxu0 0.0
    %582 = vmatpush2.msra.mxu0 0.0
    %583 = vmatprep.subr.mxu0 0.0
    %584 = vmatpush2.msra.mxu0 0.0
    %585 = vmatprep.mubr.f32.mxu0 0.0
    %586 = vmatmul.mubr.f32.gmra.mxu0 %v418
    %v587 = vpop.f32.mrf.mxu0
    %v588 = vadd.f32 %v518, %v587
    %v589 = vpop.f32.mrf.mxu0
    %590 = vdwg.mxu0
    %v591 = vld [vmem:[%s5] sm:$0x1]
    %v593 = vlaneseq
    %v594 = vshrl.u32 %v593, 7
    %v595 = vsub.s32 0, %v594
    %v596 = vrot.slane %v591, %v595
    %v598 = vadd.f32 %v588, %v596
    %599 = vst [vmem:[%s6] sm:$0xff] %v598
  $region33: #{gcn_forward.3} parent=0 // pred_fallthru
    _
  // Predicated region
  $region34: #{gcn_forward.3} parent=0 // pred_check
    _
  $region35: #{gcn_forward.3} parent=0 // pred_check_branch
    %601 = sbr.rel (0) target = $region37
  $region36: #{gcn_forward.3} parent=0 // pred_region
    _
  $region37: #{gcn_forward.3} parent=0 // pred_fallthru
    _
  // Predicated region
  $region38: #{gcn_forward.3} parent=0 // pred_check
    _
  $region39: #{gcn_forward.3} parent=0 // pred_check_branch
    %603 = sbr.rel (0) target = $region41
  $region40: #{gcn_forward.3} parent=0 // pred_region
    _
  $region41: #{gcn_forward.3} parent=0 // pred_fallthru
    _

</llo_original>
